<compile_context>
chip_gen: v7x
topology: tpu7x:2x2x1
jax: 0.10.0
libtpu: 0.0.40
codegen_flags: <defaults>
</compile_context>

<pallas_src>
import functools

import jax
import jax.numpy as jnp
from jax.experimental import pallas as pl
from jax.experimental.pallas import tpu as pltpu


# ---------------------------------------------------------------------------
# Kernels
# ---------------------------------------------------------------------------
def _layer1_kernel(a_t_ref, x_k_ref, x_i_ref, w1_ref, b1_ref, w2_ref,
                   rel_ref, root_ref, acc_ref, *, cp):
    """GraphConv(in->hid) + ReLU for one row tile, plus the (re-associated, fused)
    layer-2 feature transform h @ [W2_rel | W2_root].  K-tiled over source nodes."""
    k = pl.program_id(1)

    @pl.when(k == 0)
    def _():
        acc_ref[...] = jnp.zeros_like(acc_ref)

    # Neighbor aggregation chunk: agg[i] += sum_{j in tile k} A[j, i] * x[j].
    # Adjacency arrives as int8 (HBM bytes halved); cast on the VPU, MXU-bound dot.
    acc_ref[...] += jnp.dot(a_t_ref[...].astype(jnp.bfloat16), x_k_ref[...],
                            preferred_element_type=jnp.float32)      # [TN, FP] f32

    @pl.when(k == pl.num_programs(1) - 1)
    def _():
        # Fused rel/root matmul: [agg | x_i] @ [[W1_rel], [W1_root]] (128-aligned).
        cat = jnp.concatenate(
            [acc_ref[...].astype(jnp.bfloat16), x_i_ref[...]], axis=1)
        h = jnp.dot(cat, w1_ref[...], preferred_element_type=jnp.float32) + b1_ref[...]
        h = jnp.maximum(h, 0.0)                                       # ReLU in f32
        # TODO(synk): F.dropout(p=0.5) is identity in eval mode; intentionally skipped.

        # Layer-2 feature transform fused along the output axis: h @ [W2_rel | W2_root].
        hw = jnp.dot(h.astype(jnp.bfloat16), w2_ref[...],
                     preferred_element_type=jnp.float32)              # [TN, 2*CP]
        rel_ref[...] = hw[:, :cp].astype(jnp.bfloat16)                # feeds MXU next
        root_ref[...] = hw[:, cp:].astype(jnp.bfloat16)               # additive logit term


def _layer2_kernel(a_t_ref, rel_ref, root_ref, b2_ref, out_ref, acc_ref, *, c):
    """Layer-2 aggregation (K-tiled) + bias + masked log_softmax; lane-dense output."""
    k = pl.program_id(1)

    @pl.when(k == 0)
    def _():
        acc_ref[...] = jnp.zeros_like(acc_ref)

    # Re-associated aggregation: A^T @ (h @ W2_rel) -- the N^2 term runs at width C.
    acc_ref[...] += jnp.dot(a_t_ref[...].astype(jnp.bfloat16), rel_ref[...],
                            preferred_element_type=jnp.float32)       # [TN, CP]

    @pl.when(k == pl.num_programs(1) - 1)
    def _():
        logits = acc_ref[...] + root_ref[...].astype(jnp.float32) + b2_ref[...]

        # log_softmax over the first `c` (real) classes only; padded lanes -> 0.
        col = jax.lax.broadcasted_iota(jnp.int32, logits.shape, 1)
        valid = col < c
        masked = jnp.where(valid, logits, -jnp.inf)
        m = jnp.max(masked, axis=1, keepdims=True)
        e = jnp.exp(masked - m)                                        # exp(-inf) = 0
        lse = m + jnp.log(jnp.sum(e, axis=1, keepdims=True))
        out_ref[...] = jnp.where(valid, logits - lse, 0.0)


# ---------------------------------------------------------------------------
# Wrapper
# ---------------------------------------------------------------------------
def _round_up(v, m):
    return ((v + m - 1) // m) * m


def _tiles(n):
    """Pad N to a multiple of 256; 256-row tiles, 512 (or 256) contraction tiles."""
    n_pad = _round_up(n, 256)
    tn = 256
    tk = 512 if n_pad % 512 == 0 else 256
    return n_pad, tn, tk


def preprocess_adjacency(adj):
    """Graph-static preprocessing (call ONCE per graph, outside the jitted forward):
    binarize, transpose, cast to int8, zero-pad to the tiled size."""
    n = adj.shape[0]
    n_pad, _, _ = _tiles(n)
    a_t = (adj != 0).astype(jnp.int8).T                               # [N, N] int8
    return jnp.zeros((n_pad, n_pad), jnp.int8).at[:n, :n].set(a_t)


def graphsage_forward(x, a_t, params):
    """x: [N, Fin] f32, a_t: preprocess_adjacency(adj) int8 [Npad, Npad].
    Returns [N, C] log-probs."""
    n, fin = x.shape
    hid = params["w1_rel"].shape[1]
    c = params["w2_rel"].shape[1]

    n_pad, tn, tk = _tiles(n)
    assert a_t.shape == (n_pad, n_pad), "a_t must come from preprocess_adjacency(adj)"

    fp = _round_up(fin, 128)       # lane-padded input feature dim
    hidp = _round_up(hid, 128)     # lane-padded hidden dim (full MXU contraction)
    cp = _round_up(c, 128)         # lane-padded class dim (lane-dense output)
    grid = (n_pad // tn, n_pad // tk)

    f32, bf16 = jnp.float32, jnp.bfloat16

    # ----- small per-call padding (N x Fin and weights only; N^2 work is hoisted) -----
    x_p = jnp.zeros((n_pad, fp), bf16).at[:n, :fin].set(x.astype(bf16))

    w1_cat = jnp.zeros((2 * fp, hidp), f32)
    w1_cat = w1_cat.at[:fin, :hid].set(params["w1_rel"])
    w1_cat = w1_cat.at[fp:fp + fin, :hid].set(params["w1_root"])
    w1_cat = w1_cat.astype(bf16)                                      # [2*FP, HIDP]
    b1 = jnp.zeros((1, hidp), f32).at[:, :hid].set(params["b1"])

    w2_cat = jnp.zeros((hidp, 2 * cp), f32)
    w2_cat = w2_cat.at[:hid, :c].set(params["w2_rel"])
    w2_cat = w2_cat.at[:hid, cp:cp + c].set(params["w2_root"])
    w2_cat = w2_cat.astype(bf16)                                      # [HIDP, 2*CP]
    b2 = jnp.zeros((1, cp), f32).at[:, :c].set(params["b2"])

    cparams = pltpu.CompilerParams(
        dimension_semantics=("parallel", "arbitrary"),  # rows parallel, K reduction
        vmem_limit_bytes=48 << 20,                      # headroom on v7x's 64 MiB
    )

    # ----- layer 1 (+ fused layer-2 feature transform), row- and K-tiled -----
    rel, root = pl.pallas_call(
        functools.partial(_layer1_kernel, cp=cp),
        grid=grid,
        in_specs=[
            pl.BlockSpec((tn, tk), lambda i, k: (i, k)),         # A^T tile (int8)
            pl.BlockSpec((tk, fp), lambda i, k: (k, 0)),         # x, source-node chunk
            pl.BlockSpec((tn, fp), lambda i, k: (i, 0)),         # x, this row tile
            pl.BlockSpec((2 * fp, hidp), lambda i, k: (0, 0)),
            pl.BlockSpec((1, hidp), lambda i, k: (0, 0)),
            pl.BlockSpec((hidp, 2 * cp), lambda i, k: (0, 0)),
        ],
        out_specs=[
            pl.BlockSpec((tn, cp), lambda i, k: (i, 0)),
            pl.BlockSpec((tn, cp), lambda i, k: (i, 0)),
        ],
        out_shape=[
            jax.ShapeDtypeStruct((n_pad, cp), bf16),             # h @ W2_rel (padded)
            jax.ShapeDtypeStruct((n_pad, cp), bf16),             # h @ W2_root (padded)
        ],
        scratch_shapes=[pltpu.VMEM((tn, fp), jnp.float32)],      # agg accumulator
        compiler_params=cparams,
        cost_estimate=pl.CostEstimate(
            flops=(2 * n_pad * n_pad * fp + 2 * n_pad * (2 * fp) * hidp
                   + 2 * n_pad * hidp * (2 * cp)),
            transcendentals=0,
            bytes_accessed=(n_pad * n_pad                        # int8 A^T
                            + (n_pad // tn) * n_pad * fp * 2     # x re-streamed per row tile
                            + n_pad * fp * 2
                            + 2 * ((2 * fp) * hidp + hidp * 2 * cp) + 4 * hidp
                            + 2 * 2 * n_pad * cp)),
    )(a_t, x_p, x_p, w1_cat, b1, w2_cat)

    # ----- layer 2 aggregation + log_softmax, row- and K-tiled, lane-dense output -----
    out_padded = pl.pallas_call(
        functools.partial(_layer2_kernel, c=c),
        grid=grid,
        in_specs=[
            pl.BlockSpec((tn, tk), lambda i, k: (i, k)),         # A^T tile (int8)
            pl.BlockSpec((tk, cp), lambda i, k: (k, 0)),         # h @ W2_rel chunk
            pl.BlockSpec((tn, cp), lambda i, k: (i, 0)),         # h @ W2_root, row tile
            pl.BlockSpec((1, cp), lambda i, k: (0, 0)),          # padded bias
        ],
        out_specs=pl.BlockSpec((tn, cp), lambda i, k: (i, 0)),
        out_shape=jax.ShapeDtypeStruct((n_pad, cp), jnp.float32),
        scratch_shapes=[pltpu.VMEM((tn, cp), jnp.float32)],      # agg accumulator
        compiler_params=cparams,
        cost_estimate=pl.CostEstimate(
            flops=2 * n_pad * n_pad * cp + 4 * n_pad * cp,
            transcendentals=n_pad * cp + n_pad,
            bytes_accessed=(n_pad * n_pad
                            + (n_pad // tn) * n_pad * cp * 2
                            + n_pad * cp * 2 + 4 * cp + 4 * n_pad * cp)),
    )(a_t, rel, root, b2)

    return out_padded[:n, :c]                     # drop padded rows / class lanes


# ---------------------------------------------------------------------------
# Params / reference / demo
# ---------------------------------------------------------------------------
def init_params(key, in_channels, hidden_channels, out_channels):
    """Deterministic Glorot-uniform init. Weights stored as [in, out]."""
    ks = jax.random.split(key, 4)

    def glorot(k, fan_in, fan_out):
        lim = (6.0 / (fan_in + fan_out)) ** 0.5
        return jax.random.uniform(k, (fan_in, fan_out), jnp.float32, -lim, lim)

    return {
        "w1_rel": glorot(ks[0], in_channels, hidden_channels),
        "w1_root": glorot(ks[1], in_channels, hidden_channels),
        "b1": jnp.zeros((1, hidden_channels), jnp.float32),
        "w2_rel": glorot(ks[2], hidden_channels, out_channels),
        "w2_root": glorot(ks[3], hidden_channels, out_channels),
        "b2": jnp.zeros((1, out_channels), jnp.float32),
    }


def _reference_forward(x, adj, p):
    """Pure-JAX f32 reference of the same forward pass (for correctness check)."""
    a_t = (adj != 0).astype(jnp.float32).T
    h = jnp.maximum(a_t @ x @ p["w1_rel"] + x @ p["w1_root"] + p["b1"], 0.0)
    logits = a_t @ h @ p["w2_rel"] + h @ p["w2_root"] + p["b2"]
    return jax.nn.log_softmax(logits, axis=1)


if __name__ == "__main__":
    N, IN_C, HID, OUT_C = 16, 8, 32, 4

    key = jax.random.PRNGKey(0)
    k_x, k_adj, k_p = jax.random.split(key, 3)

    x = jax.random.normal(k_x, (N, IN_C), jnp.float32)
    # Random sparse-ish adjacency (nonzero pattern defines edges).
    adj = (jax.random.uniform(k_adj, (N, N)) > 0.7).astype(jnp.float32)

    params = init_params(k_p, IN_C, HID, OUT_C)

    # Graph-static preprocessing hoisted out of the per-call jitted path.
    a_t = preprocess_adjacency(adj)

    out = jax.jit(graphsage_forward)(x, a_t, params)
    out = jax.block_until_ready(out)

    assert out.shape == (N, OUT_C)
    # Rows of log_softmax exponentiate-sum to ~1.
    assert jnp.allclose(jnp.exp(out).sum(axis=1), 1.0, atol=1e-4)
    # Matches the f32 reference to bf16-MXU tolerance.
    ref = _reference_forward(x, adj, params)
    assert jnp.allclose(out, ref, atol=0.35, rtol=0.05)

    print("KERNEL_OK")
</pallas_src>

<mosaic_0001>
module attributes {stable_mosaic.version = 11 : i64} {
  func.func @_layer2_kernel(%arg0: i32, %arg1: i32, %arg2: memref<256x256xi8, #tpu.memory_space<vmem>>, %arg3: memref<256x128xbf16, #tpu.memory_space<vmem>>, %arg4: memref<256x128xbf16, #tpu.memory_space<vmem>>, %arg5: memref<1x128xf32, #tpu.memory_space<vmem>>, %arg6: memref<256x128xf32, #tpu.memory_space<vmem>>, %arg7: memref<256x128xf32, #tpu.memory_space<vmem>>) attributes {dimension_semantics = [#tpu.dimension_semantics<parallel>, #tpu.dimension_semantics<arbitrary>], iteration_bounds = array<i64: 1, 1>, scalar_prefetch = 0 : i64, scratch_operands = 1 : i64, tpu.core_type = #tpu.core_type<tc>, window_params = [{transform_indices = @transform_0, window_bounds = array<i64: 256, 256>}, {transform_indices = @transform_1, window_bounds = array<i64: 256, 128>}, {transform_indices = @transform_2, window_bounds = array<i64: 256, 128>}, {pipeline_mode = #tpu.pipeline_mode<synchronous>, transform_indices = @transform_3, window_bounds = array<i64: 1, 128>}, {transform_indices = @transform_4, window_bounds = array<i64: 256, 128>}]} {
    %c0_i32 = arith.constant 0 : i32
    %0 = arith.cmpi eq, %arg1, %c0_i32 : i32
    %1 = arith.extui %0 : i1 to i32
    %c0_i32_0 = arith.constant 0 : i32
    %2 = arith.cmpi ne, %1, %c0_i32_0 : i32
    scf.if %2 {
      %cst_10 = arith.constant 0.000000e+00 : f32
      %13 = vector.broadcast %cst_10 : f32 to vector<256x128xf32>
      %c0_11 = arith.constant 0 : index
      %c0_12 = arith.constant 0 : index
      %14 = vector.load %arg7[%c0_11, %c0_12] : memref<256x128xf32, #tpu.memory_space<vmem>>, vector<256x128xf32>
      tpu.vector_store %arg7[%c0_11, %c0_12], %13 {strides = array<i32>} : memref<256x128xf32, #tpu.memory_space<vmem>>, vector<256x128xf32>,
    } else {
    }
    %c0 = arith.constant 0 : index
    %c0_1 = arith.constant 0 : index
    %3 = vector.load %arg7[%c0, %c0_1] : memref<256x128xf32, #tpu.memory_space<vmem>>, vector<256x128xf32>
    %c0_2 = arith.constant 0 : index
    %c0_3 = arith.constant 0 : index
    %4 = vector.load %arg2[%c0_2, %c0_3] : memref<256x256xi8, #tpu.memory_space<vmem>>, vector<256x256xi8>
    %5 = arith.sitofp %4 : vector<256x256xi8> to vector<256x256xbf16>
    %c0_4 = arith.constant 0 : index
    %c0_5 = arith.constant 0 : index
    %6 = vector.load %arg3[%c0_4, %c0_5] : memref<256x128xbf16, #tpu.memory_space<vmem>>, vector<256x128xbf16>
    %cst = arith.constant dense<0.000000e+00> : vector<256x128xf32>
    %7 = tpu.matmul %5, %6, %cst {dimension_numbers = #tpu.dot_dimension_numbers<[1], [0], [0], [1], [0, 0, 1, 1], [], []>} : vector<256x256xbf16>, vector<256x128xbf16>, vector<256x128xf32> -> vector<256x128xf32>
    %8 = arith.addf %3, %7 : vector<256x128xf32>
    %c0_6 = arith.constant 0 : index
    %c0_7 = arith.constant 0 : index
    %9 = vector.load %arg7[%c0_6, %c0_7] : memref<256x128xf32, #tpu.memory_space<vmem>>, vector<256x128xf32>
    tpu.vector_store %arg7[%c0_6, %c0_7], %8 {strides = array<i32>} : memref<256x128xf32, #tpu.memory_space<vmem>>, vector<256x128xf32>,
    %c0_i32_8 = arith.constant 0 : i32
    %10 = arith.cmpi eq, %arg1, %c0_i32_8 : i32
    %11 = arith.extui %10 : i1 to i32
    %c0_i32_9 = arith.constant 0 : i32
    %12 = arith.cmpi ne, %11, %c0_i32_9 : i32
    scf.if %12 {
      %c0_10 = arith.constant 0 : index
      %c0_11 = arith.constant 0 : index
      %13 = vector.load %arg7[%c0_10, %c0_11] : memref<256x128xf32, #tpu.memory_space<vmem>>, vector<256x128xf32>
      %c0_12 = arith.constant 0 : index
      %c0_13 = arith.constant 0 : index
      %14 = vector.load %arg4[%c0_12, %c0_13] : memref<256x128xbf16, #tpu.memory_space<vmem>>, vector<256x128xbf16>
      %15 = arith.extf %14 : vector<256x128xbf16> to vector<256x128xf32>
      %16 = arith.addf %13, %15 : vector<256x128xf32>
      %c0_14 = arith.constant 0 : index
      %c0_15 = arith.constant 0 : index
      %17 = vector.load %arg5[%c0_14, %c0_15] : memref<1x128xf32, #tpu.memory_space<vmem>>, vector<1x128xf32>
      %18 = vector.broadcast %17 : vector<1x128xf32> to vector<256x128xf32>
      %19 = arith.addf %16, %18 : vector<256x128xf32>
      %20 = tpu.iota {dimensions = array<i32: 1>} : vector<256x128xi32>
      %c4_i32 = arith.constant 4 : i32
      %21 = vector.broadcast %c4_i32 : i32 to vector<256x128xi32>
      %22 = arith.cmpi slt, %20, %21 : vector<256x128xi32>
      %cst_16 = arith.constant 0xFF800000 : f32
      %23 = vector.broadcast %cst_16 : f32 to vector<256x128xf32>
      %24 = arith.select %22, %19, %23 : vector<256x128xi1>, vector<256x128xf32>
      %cst_17 = arith.constant dense<0xFF800000> : vector<256xf32>
      %25 = vector.multi_reduction <maximumf>, %24, %cst_17 [1] : vector<256x128xf32> to vector<256xf32>
      %26 = vector.shape_cast %25 : vector<256xf32> to vector<256x1xf32>
      %27 = vector.broadcast %26 : vector<256x1xf32> to vector<256x128xf32>
      %28 = arith.subf %24, %27 : vector<256x128xf32>
      %29 = math.exp %28 : vector<256x128xf32>
      %cst_18 = arith.constant dense<0.000000e+00> : vector<256xf32>
      %30 = vector.multi_reduction <add>, %29, %cst_18 [1] : vector<256x128xf32> to vector<256xf32>
      %31 = vector.shape_cast %30 : vector<256xf32> to vector<256x1xf32>
      %32 = math.log %31 : vector<256x1xf32>
      %33 = arith.addf %26, %32 : vector<256x1xf32>
      %34 = vector.broadcast %33 : vector<256x1xf32> to vector<256x128xf32>
      %35 = arith.subf %19, %34 : vector<256x128xf32>
      %cst_19 = arith.constant 0.000000e+00 : f32
      %36 = vector.broadcast %cst_19 : f32 to vector<256x128xf32>
      %37 = arith.select %22, %35, %36 : vector<256x128xi1>, vector<256x128xf32>
      %c0_20 = arith.constant 0 : index
      %c0_21 = arith.constant 0 : index
      %38 = vector.load %arg6[%c0_20, %c0_21] : memref<256x128xf32, #tpu.memory_space<vmem>>, vector<256x128xf32>
      tpu.vector_store %arg6[%c0_20, %c0_21], %37 {strides = array<i32>} : memref<256x128xf32, #tpu.memory_space<vmem>>, vector<256x128xf32>,
    } else {
    }
    return
  }
  func.func @transform_0(%arg0: i32, %arg1: i32) -> (i32, i32) {
    %c0_i32 = arith.constant 0 : i32
    return %arg0, %arg1 : i32, i32
  }
  func.func @transform_1(%arg0: i32, %arg1: i32) -> (i32, i32) {
    %c0_i32 = arith.constant 0 : i32
    %c0_i32_0 = arith.constant 0 : i32
    return %arg1, %c0_i32 : i32, i32
  }
  func.func @transform_2(%arg0: i32, %arg1: i32) -> (i32, i32) {
    %c0_i32 = arith.constant 0 : i32
    %c0_i32_0 = arith.constant 0 : i32
    return %arg0, %c0_i32 : i32, i32
  }
  func.func @transform_3(%arg0: i32, %arg1: i32) -> (i32, i32) {
    %c0_i32 = arith.constant 0 : i32
    %c0_i32_0 = arith.constant 0 : i32
    %c0_i32_1 = arith.constant 0 : i32
    return %c0_i32, %c0_i32_0 : i32, i32
  }
  func.func @transform_4(%arg0: i32, %arg1: i32) -> (i32, i32) {
    %c0_i32 = arith.constant 0 : i32
    %c0_i32_0 = arith.constant 0 : i32
    return %arg0, %c0_i32 : i32, i32
  }
}

module attributes {stable_mosaic.version = 11 : i64} {
  func.func @_layer1_kernel(%arg0: i32, %arg1: i32, %arg2: memref<256x256xi8, #tpu.memory_space<vmem>>, %arg3: memref<256x128xbf16, #tpu.memory_space<vmem>>, %arg4: memref<256x128xbf16, #tpu.memory_space<vmem>>, %arg5: memref<256x128xbf16, #tpu.memory_space<vmem>>, %arg6: memref<1x128xf32, #tpu.memory_space<vmem>>, %arg7: memref<128x256xbf16, #tpu.memory_space<vmem>>, %arg8: memref<256x128xbf16, #tpu.memory_space<vmem>>, %arg9: memref<256x128xbf16, #tpu.memory_space<vmem>>, %arg10: memref<256x128xf32, #tpu.memory_space<vmem>>) attributes {dimension_semantics = [#tpu.dimension_semantics<parallel>, #tpu.dimension_semantics<arbitrary>], iteration_bounds = array<i64: 1, 1>, scalar_prefetch = 0 : i64, scratch_operands = 1 : i64, tpu.core_type = #tpu.core_type<tc>, window_params = [{transform_indices = @transform_0, window_bounds = array<i64: 256, 256>}, {transform_indices = @transform_1, window_bounds = array<i64: 256, 128>}, {transform_indices = @transform_2, window_bounds = array<i64: 256, 128>}, {pipeline_mode = #tpu.pipeline_mode<synchronous>, transform_indices = @transform_3, window_bounds = array<i64: 256, 128>}, {pipeline_mode = #tpu.pipeline_mode<synchronous>, transform_indices = @transform_4, window_bounds = array<i64: 1, 128>}, {pipeline_mode = #tpu.pipeline_mode<synchronous>, transform_indices = @transform_5, window_bounds = array<i64: 128, 256>}, {transform_indices = @transform_6, window_bounds = array<i64: 256, 128>}, {transform_indices = @transform_7, window_bounds = array<i64: 256, 128>}]} {
    %c0_i32 = arith.constant 0 : i32
    %0 = arith.cmpi eq, %arg1, %c0_i32 : i32
    %1 = arith.extui %0 : i1 to i32
    %c0_i32_0 = arith.constant 0 : i32
    %2 = arith.cmpi ne, %1, %c0_i32_0 : i32
    scf.if %2 {
      %cst_10 = arith.constant 0.000000e+00 : f32
      %13 = vector.broadcast %cst_10 : f32 to vector<256x128xf32>
      %c0_11 = arith.constant 0 : index
      %c0_12 = arith.constant 0 : index
      %14 = vector.load %arg10[%c0_11, %c0_12] : memref<256x128xf32, #tpu.memory_space<vmem>>, vector<256x128xf32>
      tpu.vector_store %arg10[%c0_11, %c0_12], %13 {strides = array<i32>} : memref<256x128xf32, #tpu.memory_space<vmem>>, vector<256x128xf32>,
    } else {
    }
    %c0 = arith.constant 0 : index
    %c0_1 = arith.constant 0 : index
    %3 = vector.load %arg10[%c0, %c0_1] : memref<256x128xf32, #tpu.memory_space<vmem>>, vector<256x128xf32>
    %c0_2 = arith.constant 0 : index
    %c0_3 = arith.constant 0 : index
    %4 = vector.load %arg2[%c0_2, %c0_3] : memref<256x256xi8, #tpu.memory_space<vmem>>, vector<256x256xi8>
    %5 = arith.sitofp %4 : vector<256x256xi8> to vector<256x256xbf16>
    %c0_4 = arith.constant 0 : index
    %c0_5 = arith.constant 0 : index
    %6 = vector.load %arg3[%c0_4, %c0_5] : memref<256x128xbf16, #tpu.memory_space<vmem>>, vector<256x128xbf16>
    %cst = arith.constant dense<0.000000e+00> : vector<256x128xf32>
    %7 = tpu.matmul %5, %6, %cst {dimension_numbers = #tpu.dot_dimension_numbers<[1], [0], [0], [1], [0, 0, 1, 1], [], []>} : vector<256x256xbf16>, vector<256x128xbf16>, vector<256x128xf32> -> vector<256x128xf32>
    %8 = arith.addf %3, %7 : vector<256x128xf32>
    %c0_6 = arith.constant 0 : index
    %c0_7 = arith.constant 0 : index
    %9 = vector.load %arg10[%c0_6, %c0_7] : memref<256x128xf32, #tpu.memory_space<vmem>>, vector<256x128xf32>
    tpu.vector_store %arg10[%c0_6, %c0_7], %8 {strides = array<i32>} : memref<256x128xf32, #tpu.memory_space<vmem>>, vector<256x128xf32>,
    %c0_i32_8 = arith.constant 0 : i32
    %10 = arith.cmpi eq, %arg1, %c0_i32_8 : i32
    %11 = arith.extui %10 : i1 to i32
    %c0_i32_9 = arith.constant 0 : i32
    %12 = arith.cmpi ne, %11, %c0_i32_9 : i32
    scf.if %12 {
      %c0_10 = arith.constant 0 : index
      %c0_11 = arith.constant 0 : index
      %13 = vector.load %arg10[%c0_10, %c0_11] : memref<256x128xf32, #tpu.memory_space<vmem>>, vector<256x128xf32>
      %14 = arith.truncf %13 : vector<256x128xf32> to vector<256x128xbf16>
      %c0_12 = arith.constant 0 : index
      %c0_13 = arith.constant 0 : index
      %15 = vector.load %arg4[%c0_12, %c0_13] : memref<256x128xbf16, #tpu.memory_space<vmem>>, vector<256x128xbf16>
      %16 = tpu.concatenate %14, %15 in 1 : vector<256x128xbf16>, vector<256x128xbf16> -> vector<256x256xbf16>
      %c0_14 = arith.constant 0 : index
      %c0_15 = arith.constant 0 : index
      %17 = vector.load %arg5[%c0_14, %c0_15] : memref<256x128xbf16, #tpu.memory_space<vmem>>, vector<256x128xbf16>
      %cst_16 = arith.constant dense<0.000000e+00> : vector<256x128xf32>
      %18 = tpu.matmul %16, %17, %cst_16 {dimension_numbers = #tpu.dot_dimension_numbers<[1], [0], [0], [1], [0, 0, 1, 1], [], []>} : vector<256x256xbf16>, vector<256x128xbf16>, vector<256x128xf32> -> vector<256x128xf32>
      %c0_17 = arith.constant 0 : index
      %c0_18 = arith.constant 0 : index
      %19 = vector.load %arg6[%c0_17, %c0_18] : memref<1x128xf32, #tpu.memory_space<vmem>>, vector<1x128xf32>
      %20 = vector.broadcast %19 : vector<1x128xf32> to vector<256x128xf32>
      %21 = arith.addf %18, %20 : vector<256x128xf32>
      %cst_19 = arith.constant 0.000000e+00 : f32
      %22 = vector.broadcast %cst_19 : f32 to vector<256x128xf32>
      %23 = arith.maximumf %21, %22 : vector<256x128xf32>
      %24 = arith.truncf %23 : vector<256x128xf32> to vector<256x128xbf16>
      %c0_20 = arith.constant 0 : index
      %c0_21 = arith.constant 0 : index
      %25 = vector.load %arg7[%c0_20, %c0_21] : memref<128x256xbf16, #tpu.memory_space<vmem>>, vector<128x256xbf16>
      %cst_22 = arith.constant dense<0.000000e+00> : vector<256x256xf32>
      %26 = tpu.matmul %24, %25, %cst_22 {dimension_numbers = #tpu.dot_dimension_numbers<[1], [0], [0], [1], [0, 0, 1, 1], [], []>} : vector<256x128xbf16>, vector<128x256xbf16>, vector<256x256xf32> -> vector<256x256xf32>
      %27 = vector.extract_strided_slice %26 {offsets = [0, 0], sizes = [256, 128], strides = [1, 1]} : vector<256x256xf32> to vector<256x128xf32>
      %28 = arith.truncf %27 : vector<256x128xf32> to vector<256x128xbf16>
      %c0_23 = arith.constant 0 : index
      %c0_24 = arith.constant 0 : index
      %29 = vector.load %arg8[%c0_23, %c0_24] : memref<256x128xbf16, #tpu.memory_space<vmem>>, vector<256x128xbf16>
      tpu.vector_store %arg8[%c0_23, %c0_24], %28 {strides = array<i32>} : memref<256x128xbf16, #tpu.memory_space<vmem>>, vector<256x128xbf16>,
      %30 = vector.extract_strided_slice %26 {offsets = [0, 128], sizes = [256, 128], strides = [1, 1]} : vector<256x256xf32> to vector<256x128xf32>
      %31 = arith.truncf %30 : vector<256x128xf32> to vector<256x128xbf16>
      %c0_25 = arith.constant 0 : index
      %c0_26 = arith.constant 0 : index
      %32 = vector.load %arg9[%c0_25, %c0_26] : memref<256x128xbf16, #tpu.memory_space<vmem>>, vector<256x128xbf16>
      tpu.vector_store %arg9[%c0_25, %c0_26], %31 {strides = array<i32>} : memref<256x128xbf16, #tpu.memory_space<vmem>>, vector<256x128xbf16>,
    } else {
    }
    return
  }
  func.func @transform_0(%arg0: i32, %arg1: i32) -> (i32, i32) {
    %c0_i32 = arith.constant 0 : i32
    return %arg0, %arg1 : i32, i32
  }
  func.func @transform_1(%arg0: i32, %arg1: i32) -> (i32, i32) {
    %c0_i32 = arith.constant 0 : i32
    %c0_i32_0 = arith.constant 0 : i32
    return %arg1, %c0_i32 : i32, i32
  }
  func.func @transform_2(%arg0: i32, %arg1: i32) -> (i32, i32) {
    %c0_i32 = arith.constant 0 : i32
    %c0_i32_0 = arith.constant 0 : i32
    return %arg0, %c0_i32 : i32, i32
  }
  func.func @transform_3(%arg0: i32, %arg1: i32) -> (i32, i32) {
    %c0_i32 = arith.constant 0 : i32
    %c0_i32_0 = arith.constant 0 : i32
    %c0_i32_1 = arith.constant 0 : i32
    return %c0_i32, %c0_i32_0 : i32, i32
  }
  func.func @transform_4(%arg0: i32, %arg1: i32) -> (i32, i32) {
    %c0_i32 = arith.constant 0 : i32
    %c0_i32_0 = arith.constant 0 : i32
    %c0_i32_1 = arith.constant 0 : i32
    return %c0_i32, %c0_i32_0 : i32, i32
  }
  func.func @transform_5(%arg0: i32, %arg1: i32) -> (i32, i32) {
    %c0_i32 = arith.constant 0 : i32
    %c0_i32_0 = arith.constant 0 : i32
    %c0_i32_1 = arith.constant 0 : i32
    return %c0_i32, %c0_i32_0 : i32, i32
  }
  func.func @transform_6(%arg0: i32, %arg1: i32) -> (i32, i32) {
    %c0_i32 = arith.constant 0 : i32
    %c0_i32_0 = arith.constant 0 : i32
    return %arg0, %c0_i32 : i32, i32
  }
  func.func @transform_7(%arg0: i32, %arg1: i32) -> (i32, i32) {
    %c0_i32 = arith.constant 0 : i32
    %c0_i32_0 = arith.constant 0 : i32
    return %arg0, %c0_i32 : i32, i32
  }
}

</mosaic_0001>

<llo_original>
// kernel: graphsage_forward.3
$region0: #{graphsage_forward.3}
  #allocation0 [shape = 'u32[]', space=smem, size = 0x4, offset = 0x4, fixed_abs, tag = 'smem constant byte address 0x4 - core index']
  #allocation1 [shape = 'u32[144,128]{1,0:T(1,128)}', space=vmem, size = 0x12000, scoped, tag = 'internal scratch']
  #allocation2 [shape = 'f32[256,128]{1,0:T(8,128)}', space=vmem, size = 0x20000, scoped, tag = 'scratch operand']
  %s0 = inlined_call_operand.vmem [shape: s8[256,256], index: 0, kind: input, shape index: {}]
  %s1 = inlined_call_operand.vmem [shape: bf16[256,128], index: 1, kind: input, shape index: {}]
  %s2 = inlined_call_operand.vmem [shape: bf16[256,128], index: 2, kind: input, shape index: {}]
  %s3 = inlined_call_operand.vmem [shape: f32[1,128], index: 3, kind: input, shape index: {}]
  %s4 = inlined_call_operand.vmem [shape: f32[256,128], index: 4, kind: output, shape index: {}]
  %s5 = sld [smem:[#allocation0]]
  $region34: #{graphsage_forward.3} parent=0
    _
  %s7 = ssub.s32 1, %s5
  %s8 = scalar_select 0, %s7, %s5
  // Predicated region
  $region2: #{graphsage_forward.3} parent=0 // pred_check
    _
  $region3: #{graphsage_forward.3} parent=0 // pred_check_branch
    %10 = sbr.rel (0) target = $region5
  $region4: #{graphsage_forward.3} parent=0 // pred_region
    _
  $region5: #{graphsage_forward.3} parent=0 // pred_fallthru
    _
  // Predicated region
  $region6: #{graphsage_forward.3} parent=0 // pred_check
    _
  $region7: #{graphsage_forward.3} parent=0 // pred_check_branch
    %12 = sbr.rel (0) target = $region9
  $region8: #{graphsage_forward.3} parent=0 // pred_region
    _
  $region9: #{graphsage_forward.3} parent=0 // pred_fallthru
    _
  // Predicated region
  $region10: #{graphsage_forward.3} parent=0 // pred_check
    _
  $region11: #{graphsage_forward.3} parent=0 // pred_check_branch
    %14 = sbr.rel (0) target = $region13
  $region12: #{graphsage_forward.3} parent=0 // pred_region
    _
  $region13: #{graphsage_forward.3} parent=0 // pred_fallthru
    _
  // Predicated region
  $region14: #{graphsage_forward.3} parent=0 // pred_check
    _
  $region15: #{graphsage_forward.3} parent=0 // pred_check_branch
    %16 = sbr.rel (0) target = $region17
  $region16: #{graphsage_forward.3} parent=0 // pred_region
    _
  $region17: #{graphsage_forward.3} parent=0 // pred_fallthru
    _
  %p18 = scmp.eq.s32.totalorder 0, 0
  // Predicated region
  $region18: #{graphsage_forward.3} parent=0 // pred_check
    %p19 = pneg %p18
  $region19: #{graphsage_forward.3} parent=0 // pred_check_branch
    %21 = sbr.rel (%p19) target = $region21
  $region20: #{graphsage_forward.3} parent=0 // pred_region
    %22 = vst [vmem:[#allocation2] sm:$0xff] 0.0
    %23 = vst [vmem:[#allocation2 + $0x8] sm:$0xff] 0.0
    %24 = vst [vmem:[#allocation2 + $0x10] sm:$0xff] 0.0
    %25 = vst [vmem:[#allocation2 + $0x18] sm:$0xff] 0.0
    %26 = vst [vmem:[#allocation2 + $0x20] sm:$0xff] 0.0
    %27 = vst [vmem:[#allocation2 + $0x28] sm:$0xff] 0.0
    %28 = vst [vmem:[#allocation2 + $0x30] sm:$0xff] 0.0
    %29 = vst [vmem:[#allocation2 + $0x38] sm:$0xff] 0.0
    %30 = vst [vmem:[#allocation2 + $0x40] sm:$0xff] 0.0
    %31 = vst [vmem:[#allocation2 + $0x48] sm:$0xff] 0.0
    %32 = vst [vmem:[#allocation2 + $0x50] sm:$0xff] 0.0
    %33 = vst [vmem:[#allocation2 + $0x58] sm:$0xff] 0.0
    %34 = vst [vmem:[#allocation2 + $0x60] sm:$0xff] 0.0
    %35 = vst [vmem:[#allocation2 + $0x68] sm:$0xff] 0.0
    %36 = vst [vmem:[#allocation2 + $0x70] sm:$0xff] 0.0
    %37 = vst [vmem:[#allocation2 + $0x78] sm:$0xff] 0.0
    %38 = vst [vmem:[#allocation2 + $0x80] sm:$0xff] 0.0
    %39 = vst [vmem:[#allocation2 + $0x88] sm:$0xff] 0.0
    %40 = vst [vmem:[#allocation2 + $0x90] sm:$0xff] 0.0
    %41 = vst [vmem:[#allocation2 + $0x98] sm:$0xff] 0.0
    %42 = vst [vmem:[#allocation2 + $0xa0] sm:$0xff] 0.0
    %43 = vst [vmem:[#allocation2 + $0xa8] sm:$0xff] 0.0
    %44 = vst [vmem:[#allocation2 + $0xb0] sm:$0xff] 0.0
    %45 = vst [vmem:[#allocation2 + $0xb8] sm:$0xff] 0.0
    %46 = vst [vmem:[#allocation2 + $0xc0] sm:$0xff] 0.0
    %47 = vst [vmem:[#allocation2 + $0xc8] sm:$0xff] 0.0
    %48 = vst [vmem:[#allocation2 + $0xd0] sm:$0xff] 0.0
    %49 = vst [vmem:[#allocation2 + $0xd8] sm:$0xff] 0.0
    %50 = vst [vmem:[#allocation2 + $0xe0] sm:$0xff] 0.0
    %51 = vst [vmem:[#allocation2 + $0xe8] sm:$0xff] 0.0
    %52 = vst [vmem:[#allocation2 + $0xf0] sm:$0xff] 0.0
    %53 = vst [vmem:[#allocation2 + $0xf8] sm:$0xff] 0.0
  $region21: #{graphsage_forward.3} parent=0 // pred_fallthru
    _
  %v54 = vld [vmem:[#allocation2] sm:$0xff]
  %v55 = vld [vmem:[#allocation2 + $0x8] sm:$0xff]
  %v56 = vld [vmem:[#allocation2 + $0x10] sm:$0xff]
  %v57 = vld [vmem:[#allocation2 + $0x18] sm:$0xff]
  %v58 = vld [vmem:[#allocation2 + $0x20] sm:$0xff]
  %v59 = vld [vmem:[#allocation2 + $0x28] sm:$0xff]
  %v60 = vld [vmem:[#allocation2 + $0x30] sm:$0xff]
  %v61 = vld [vmem:[#allocation2 + $0x38] sm:$0xff]
  %v62 = vld [vmem:[#allocation2 + $0x40] sm:$0xff]
  %v63 = vld [vmem:[#allocation2 + $0x48] sm:$0xff]
  %v64 = vld [vmem:[#allocation2 + $0x50] sm:$0xff]
  %v65 = vld [vmem:[#allocation2 + $0x58] sm:$0xff]
  %v66 = vld [vmem:[#allocation2 + $0x60] sm:$0xff]
  %v67 = vld [vmem:[#allocation2 + $0x68] sm:$0xff]
  %v68 = vld [vmem:[#allocation2 + $0x70] sm:$0xff]
  %v69 = vld [vmem:[#allocation2 + $0x78] sm:$0xff]
  %v70 = vld [vmem:[#allocation2 + $0x80] sm:$0xff]
  %v71 = vld [vmem:[#allocation2 + $0x88] sm:$0xff]
  %v72 = vld [vmem:[#allocation2 + $0x90] sm:$0xff]
  %v73 = vld [vmem:[#allocation2 + $0x98] sm:$0xff]
  %v74 = vld [vmem:[#allocation2 + $0xa0] sm:$0xff]
  %v75 = vld [vmem:[#allocation2 + $0xa8] sm:$0xff]
  %v76 = vld [vmem:[#allocation2 + $0xb0] sm:$0xff]
  %v77 = vld [vmem:[#allocation2 + $0xb8] sm:$0xff]
  %v78 = vld [vmem:[#allocation2 + $0xc0] sm:$0xff]
  %v79 = vld [vmem:[#allocation2 + $0xc8] sm:$0xff]
  %v80 = vld [vmem:[#allocation2 + $0xd0] sm:$0xff]
  %v81 = vld [vmem:[#allocation2 + $0xd8] sm:$0xff]
  %v82 = vld [vmem:[#allocation2 + $0xe0] sm:$0xff]
  %v83 = vld [vmem:[#allocation2 + $0xe8] sm:$0xff]
  %v84 = vld [vmem:[#allocation2 + $0xf0] sm:$0xff]
  %v85 = vld [vmem:[#allocation2 + $0xf8] sm:$0xff]
  %v86 = vld [vmem:[%s0] sm:$0xff]
  %v87 = vld [vmem:[%s0 + $0x8] sm:$0xff]
  %v88 = vld [vmem:[%s0 + $0x10] sm:$0xff]
  %v89 = vld [vmem:[%s0 + $0x18] sm:$0xff]
  %v90 = vld [vmem:[%s0 + $0x20] sm:$0xff]
  %v91 = vld [vmem:[%s0 + $0x28] sm:$0xff]
  %v92 = vld [vmem:[%s0 + $0x30] sm:$0xff]
  %v93 = vld [vmem:[%s0 + $0x38] sm:$0xff]
  %v94 = vld [vmem:[%s0 + $0x40] sm:$0xff]
  %v95 = vld [vmem:[%s0 + $0x48] sm:$0xff]
  %v96 = vld [vmem:[%s0 + $0x50] sm:$0xff]
  %v97 = vld [vmem:[%s0 + $0x58] sm:$0xff]
  %v98 = vld [vmem:[%s0 + $0x60] sm:$0xff]
  %v99 = vld [vmem:[%s0 + $0x68] sm:$0xff]
  %v100 = vld [vmem:[%s0 + $0x70] sm:$0xff]
  %v101 = vld [vmem:[%s0 + $0x78] sm:$0xff]
  %v102 = vunpack.c.l.s8.bf16 %v86
  %v103 = vunpack.c.l.s8.bf16 %v87
  %v104 = vunpack.c.h.s8.bf16 %v86
  %v105 = vunpack.c.h.s8.bf16 %v87
  %v106 = vunpack.c.l.s8.bf16 %v88
  %v107 = vunpack.c.l.s8.bf16 %v89
  %v108 = vunpack.c.h.s8.bf16 %v88
  %v109 = vunpack.c.h.s8.bf16 %v89
  %v110 = vunpack.c.l.s8.bf16 %v90
  %v111 = vunpack.c.l.s8.bf16 %v91
  %v112 = vunpack.c.h.s8.bf16 %v90
  %v113 = vunpack.c.h.s8.bf16 %v91
  %v114 = vunpack.c.l.s8.bf16 %v92
  %v115 = vunpack.c.l.s8.bf16 %v93
  %v116 = vunpack.c.h.s8.bf16 %v92
  %v117 = vunpack.c.h.s8.bf16 %v93
  %v118 = vunpack.c.l.s8.bf16 %v94
  %v119 = vunpack.c.l.s8.bf16 %v95
  %v120 = vunpack.c.h.s8.bf16 %v94
  %v121 = vunpack.c.h.s8.bf16 %v95
  %v122 = vunpack.c.l.s8.bf16 %v96
  %v123 = vunpack.c.l.s8.bf16 %v97
  %v124 = vunpack.c.h.s8.bf16 %v96
  %v125 = vunpack.c.h.s8.bf16 %v97
  %v126 = vunpack.c.l.s8.bf16 %v98
  %v127 = vunpack.c.l.s8.bf16 %v99
  %v128 = vunpack.c.h.s8.bf16 %v98
  %v129 = vunpack.c.h.s8.bf16 %v99
  %v130 = vunpack.c.l.s8.bf16 %v100
  %v131 = vunpack.c.l.s8.bf16 %v101
  %v132 = vunpack.c.h.s8.bf16 %v100
  %v133 = vunpack.c.h.s8.bf16 %v101
  %v134 = vld [vmem:[%s1] sm:$0xf]
  %v135 = vld [vmem:[%s1 + $0x4] sm:$0xf]
  %v136 = vld [vmem:[%s1 + $0x8] sm:$0xf]
  %v137 = vld [vmem:[%s1 + $0xc] sm:$0xf]
  %v138 = vld [vmem:[%s1 + $0x10] sm:$0xf]
  %v139 = vld [vmem:[%s1 + $0x14] sm:$0xf]
  %v140 = vld [vmem:[%s1 + $0x18] sm:$0xf]
  %v141 = vld [vmem:[%s1 + $0x1c] sm:$0xf]
  %v142 = vld [vmem:[%s1 + $0x20] sm:$0xf]
  %v143 = vld [vmem:[%s1 + $0x24] sm:$0xf]
  %v144 = vld [vmem:[%s1 + $0x28] sm:$0xf]
  %v145 = vld [vmem:[%s1 + $0x2c] sm:$0xf]
  %v146 = vld [vmem:[%s1 + $0x30] sm:$0xf]
  %v147 = vld [vmem:[%s1 + $0x34] sm:$0xf]
  %v148 = vld [vmem:[%s1 + $0x38] sm:$0xf]
  %v149 = vld [vmem:[%s1 + $0x3c] sm:$0xf]
  %v150 = vld [vmem:[%s1 + $0x40] sm:$0xf]
  %v151 = vld [vmem:[%s1 + $0x44] sm:$0xf]
  %v152 = vld [vmem:[%s1 + $0x48] sm:$0xf]
  %v153 = vld [vmem:[%s1 + $0x4c] sm:$0xf]
  %v154 = vld [vmem:[%s1 + $0x50] sm:$0xf]
  %v155 = vld [vmem:[%s1 + $0x54] sm:$0xf]
  %v156 = vld [vmem:[%s1 + $0x58] sm:$0xf]
  %v157 = vld [vmem:[%s1 + $0x5c] sm:$0xf]
  %v158 = vld [vmem:[%s1 + $0x60] sm:$0xf]
  %v159 = vld [vmem:[%s1 + $0x64] sm:$0xf]
  %v160 = vld [vmem:[%s1 + $0x68] sm:$0xf]
  %v161 = vld [vmem:[%s1 + $0x6c] sm:$0xf]
  %v162 = vld [vmem:[%s1 + $0x70] sm:$0xf]
  %v163 = vld [vmem:[%s1 + $0x74] sm:$0xf]
  %v164 = vld [vmem:[%s1 + $0x78] sm:$0xf]
  %v165 = vld [vmem:[%s1 + $0x7c] sm:$0xf]
  %v198 = vunpack.c.l.b16 %v134
  %v199 = vunpack.c.l.b16 %v135
  %v200 = vunpack.c.l.b16 %v136
  %v201 = vunpack.c.l.b16 %v137
  %v202 = vunpack.c.l.b16 %v138
  %v203 = vunpack.c.l.b16 %v139
  %v204 = vunpack.c.l.b16 %v140
  %v205 = vunpack.c.l.b16 %v141
  %v206 = vunpack.c.l.b16 %v142
  %v207 = vunpack.c.l.b16 %v143
  %v208 = vunpack.c.l.b16 %v144
  %v209 = vunpack.c.l.b16 %v145
  %v210 = vunpack.c.l.b16 %v146
  %v211 = vunpack.c.l.b16 %v147
  %v212 = vunpack.c.l.b16 %v148
  %v213 = vunpack.c.l.b16 %v149
  %v214 = vunpack.c.l.b16 %v150
  %v215 = vunpack.c.l.b16 %v151
  %v216 = vunpack.c.l.b16 %v152
  %v217 = vunpack.c.l.b16 %v153
  %v218 = vunpack.c.l.b16 %v154
  %v219 = vunpack.c.l.b16 %v155
  %v220 = vunpack.c.l.b16 %v156
  %v221 = vunpack.c.l.b16 %v157
  %v222 = vunpack.c.l.b16 %v158
  %v223 = vunpack.c.l.b16 %v159
  %v224 = vunpack.c.l.b16 %v160
  %v225 = vunpack.c.l.b16 %v161
  %v226 = vunpack.c.l.b16 %v162
  %v227 = vunpack.c.l.b16 %v163
  %v228 = vunpack.c.l.b16 %v164
  %v229 = vunpack.c.l.b16 %v165
  %v230 = vpack.c.b16 %v199, %v198
  %v231 = vpack.c.b16 %v201, %v200
  %v232 = vpack.c.b16 %v203, %v202
  %v233 = vpack.c.b16 %v205, %v204
  %v234 = vpack.c.b16 %v207, %v206
  %v235 = vpack.c.b16 %v209, %v208
  %v236 = vpack.c.b16 %v211, %v210
  %v237 = vpack.c.b16 %v213, %v212
  %v238 = vpack.c.b16 %v215, %v214
  %v239 = vpack.c.b16 %v217, %v216
  %v240 = vpack.c.b16 %v219, %v218
  %v241 = vpack.c.b16 %v221, %v220
  %v242 = vpack.c.b16 %v223, %v222
  %v243 = vpack.c.b16 %v225, %v224
  %v244 = vpack.c.b16 %v227, %v226
  %v245 = vpack.c.b16 %v229, %v228
  %262 = vmatprep.subr.bf16.mxu0 0
  %263 = vmatpush1.bf16.msra.mxu0 %v230
  %264 = vmatprep.subr.bf16.mxu0 0
  %265 = vmatpush1.bf16.msra.mxu0 %v231
  %266 = vmatprep.subr.bf16.mxu0 0
  %267 = vmatpush1.bf16.msra.mxu0 %v232
  %268 = vmatprep.subr.bf16.mxu0 0
  %269 = vmatpush1.bf16.msra.mxu0 %v233
  %270 = vmatprep.subr.bf16.mxu0 0
  %271 = vmatpush1.bf16.msra.mxu0 %v234
  %272 = vmatprep.subr.bf16.mxu0 0
  %273 = vmatpush1.bf16.msra.mxu0 %v235
  %274 = vmatprep.subr.bf16.mxu0 0
  %275 = vmatpush1.bf16.msra.mxu0 %v236
  %276 = vmatprep.subr.bf16.mxu0 0
  %277 = vmatpush1.bf16.msra.mxu0 %v237
  %278 = vmatprep.subr.bf16.mxu0 0
  %279 = vmatpush1.bf16.msra.mxu0 %v238
  %280 = vmatprep.subr.bf16.mxu0 0
  %281 = vmatpush1.bf16.msra.mxu0 %v239
  %282 = vmatprep.subr.bf16.mxu0 0
  %283 = vmatpush1.bf16.msra.mxu0 %v240
  %284 = vmatprep.subr.bf16.mxu0 0
  %285 = vmatpush1.bf16.msra.mxu0 %v241
  %286 = vmatprep.subr.bf16.mxu0 0
  %287 = vmatpush1.bf16.msra.mxu0 %v242
  %288 = vmatprep.subr.bf16.mxu0 0
  %289 = vmatpush1.bf16.msra.mxu0 %v243
  %290 = vmatprep.subr.bf16.mxu0 0
  %291 = vmatpush1.bf16.msra.mxu0 %v244
  %292 = vmatprep.subr.bf16.mxu0 0
  %293 = vmatpush1.bf16.msra.mxu0 %v245
  %294 = vmatprep.mubr.bf16.mxu0 %v103
  %295 = vmatmul.mubr.bf16.gmra.mrb[0].mxu0 %v102
  %v296 = vpop.f32.mrb[0].mxu0
  %v297 = vadd.f32 0.0, %v296
  %v298 = vpop.f32.mrb[0].mxu0
  %v299 = vpop.f32.mrb[0].mxu0
  %v300 = vadd.f32 0.0, %v299
  %v301 = vpop.f32.mrb[0].mxu0
  %302 = vmatprep.mubr.bf16.mxu0 %v105
  %303 = vmatmul.mubr.bf16.gmra.mrb[0].mxu0 %v104
  %v304 = vpop.f32.mrb[0].mxu0
  %v305 = vadd.f32 0.0, %v304
  %v306 = vpop.f32.mrb[0].mxu0
  %v307 = vpop.f32.mrb[0].mxu0
  %v308 = vadd.f32 0.0, %v307
  %v309 = vpop.f32.mrb[0].mxu0
  %310 = vmatprep.mubr.bf16.mxu0 %v107
  %311 = vmatmul.mubr.bf16.gmra.mrb[0].mxu0 %v106
  %v312 = vpop.f32.mrb[0].mxu0
  %v313 = vadd.f32 0.0, %v312
  %v314 = vpop.f32.mrb[0].mxu0
  %v315 = vpop.f32.mrb[0].mxu0
  %v316 = vadd.f32 0.0, %v315
  %v317 = vpop.f32.mrb[0].mxu0
  %318 = vmatprep.mubr.bf16.mxu0 %v109
  %319 = vmatmul.mubr.bf16.gmra.mrb[0].mxu0 %v108
  %v320 = vpop.f32.mrb[0].mxu0
  %v321 = vadd.f32 0.0, %v320
  %v322 = vpop.f32.mrb[0].mxu0
  %v323 = vpop.f32.mrb[0].mxu0
  %v324 = vadd.f32 0.0, %v323
  %v325 = vpop.f32.mrb[0].mxu0
  %326 = vmatprep.mubr.bf16.mxu0 %v111
  %327 = vmatmul.mubr.bf16.gmra.mrb[0].mxu0 %v110
  %v328 = vpop.f32.mrb[0].mxu0
  %v329 = vadd.f32 0.0, %v328
  %v330 = vpop.f32.mrb[0].mxu0
  %v331 = vpop.f32.mrb[0].mxu0
  %v332 = vadd.f32 0.0, %v331
  %v333 = vpop.f32.mrb[0].mxu0
  %334 = vmatprep.mubr.bf16.mxu0 %v113
  %335 = vmatmul.mubr.bf16.gmra.mrb[0].mxu0 %v112
  %v336 = vpop.f32.mrb[0].mxu0
  %v337 = vadd.f32 0.0, %v336
  %v338 = vpop.f32.mrb[0].mxu0
  %v339 = vpop.f32.mrb[0].mxu0
  %v340 = vadd.f32 0.0, %v339
  %v341 = vpop.f32.mrb[0].mxu0
  %342 = vmatprep.mubr.bf16.mxu0 %v115
  %343 = vmatmul.mubr.bf16.gmra.mrb[0].mxu0 %v114
  %v344 = vpop.f32.mrb[0].mxu0
  %v345 = vadd.f32 0.0, %v344
  %v346 = vpop.f32.mrb[0].mxu0
  %v347 = vpop.f32.mrb[0].mxu0
  %v348 = vadd.f32 0.0, %v347
  %v349 = vpop.f32.mrb[0].mxu0
  %350 = vmatprep.mubr.bf16.mxu0 %v117
  %351 = vmatmul.mubr.bf16.gmra.mrb[0].mxu0 %v116
  %v352 = vpop.f32.mrb[0].mxu0
  %v353 = vadd.f32 0.0, %v352
  %v354 = vpop.f32.mrb[0].mxu0
  %v355 = vpop.f32.mrb[0].mxu0
  %v356 = vadd.f32 0.0, %v355
  %v357 = vpop.f32.mrb[0].mxu0
  %358 = vmatprep.mubr.bf16.mxu0 %v119
  %359 = vmatmul.mubr.bf16.gmra.mrb[0].mxu0 %v118
  %v360 = vpop.f32.mrb[0].mxu0
  %v361 = vadd.f32 0.0, %v360
  %v362 = vpop.f32.mrb[0].mxu0
  %v363 = vpop.f32.mrb[0].mxu0
  %v364 = vadd.f32 0.0, %v363
  %v365 = vpop.f32.mrb[0].mxu0
  %366 = vmatprep.mubr.bf16.mxu0 %v121
  %367 = vmatmul.mubr.bf16.gmra.mrb[0].mxu0 %v120
  %v368 = vpop.f32.mrb[0].mxu0
  %v369 = vadd.f32 0.0, %v368
  %v370 = vpop.f32.mrb[0].mxu0
  %v371 = vpop.f32.mrb[0].mxu0
  %v372 = vadd.f32 0.0, %v371
  %v373 = vpop.f32.mrb[0].mxu0
  %374 = vmatprep.mubr.bf16.mxu0 %v123
  %375 = vmatmul.mubr.bf16.gmra.mrb[0].mxu0 %v122
  %v376 = vpop.f32.mrb[0].mxu0
  %v377 = vadd.f32 0.0, %v376
  %v378 = vpop.f32.mrb[0].mxu0
  %v379 = vpop.f32.mrb[0].mxu0
  %v380 = vadd.f32 0.0, %v379
  %v381 = vpop.f32.mrb[0].mxu0
  %382 = vmatprep.mubr.bf16.mxu0 %v125
  %383 = vmatmul.mubr.bf16.gmra.mrb[0].mxu0 %v124
  %v384 = vpop.f32.mrb[0].mxu0
  %v385 = vadd.f32 0.0, %v384
  %v386 = vpop.f32.mrb[0].mxu0
  %v387 = vpop.f32.mrb[0].mxu0
  %v388 = vadd.f32 0.0, %v387
  %v389 = vpop.f32.mrb[0].mxu0
  %390 = vmatprep.mubr.bf16.mxu0 %v127
  %391 = vmatmul.mubr.bf16.gmra.mrb[0].mxu0 %v126
  %v392 = vpop.f32.mrb[0].mxu0
  %v393 = vadd.f32 0.0, %v392
  %v394 = vpop.f32.mrb[0].mxu0
  %v395 = vpop.f32.mrb[0].mxu0
  %v396 = vadd.f32 0.0, %v395
  %v397 = vpop.f32.mrb[0].mxu0
  %398 = vmatprep.mubr.bf16.mxu0 %v129
  %399 = vmatmul.mubr.bf16.gmra.mrb[0].mxu0 %v128
  %v400 = vpop.f32.mrb[0].mxu0
  %v401 = vadd.f32 0.0, %v400
  %v402 = vpop.f32.mrb[0].mxu0
  %v403 = vpop.f32.mrb[0].mxu0
  %v404 = vadd.f32 0.0, %v403
  %v405 = vpop.f32.mrb[0].mxu0
  %406 = vmatprep.mubr.bf16.mxu0 %v131
  %407 = vmatmul.mubr.bf16.gmra.mrb[0].mxu0 %v130
  %v408 = vpop.f32.mrb[0].mxu0
  %v409 = vadd.f32 0.0, %v408
  %v410 = vpop.f32.mrb[0].mxu0
  %v411 = vpop.f32.mrb[0].mxu0
  %v412 = vadd.f32 0.0, %v411
  %v413 = vpop.f32.mrb[0].mxu0
  %414 = vmatprep.mubr.bf16.mxu0 %v133
  %415 = vmatmul.mubr.bf16.gmra.mrb[0].mxu0 %v132
  %v416 = vpop.f32.mrb[0].mxu0
  %v417 = vadd.f32 0.0, %v416
  %v418 = vpop.f32.mrb[0].mxu0
  %v419 = vpop.f32.mrb[0].mxu0
  %v420 = vadd.f32 0.0, %v419
  %v421 = vpop.f32.mrb[0].mxu0
  %422 = vdwg.mxu0
  %v423 = vadd.f32 %v54, %v297
  %v424 = vadd.f32 %v55, %v300
  %v425 = vadd.f32 %v56, %v305
  %v426 = vadd.f32 %v57, %v308
  %v427 = vadd.f32 %v58, %v313
  %v428 = vadd.f32 %v59, %v316
  %v429 = vadd.f32 %v60, %v321
  %v430 = vadd.f32 %v61, %v324
  %v431 = vadd.f32 %v62, %v329
  %v432 = vadd.f32 %v63, %v332
  %v433 = vadd.f32 %v64, %v337
  %v434 = vadd.f32 %v65, %v340
  %v435 = vadd.f32 %v66, %v345
  %v436 = vadd.f32 %v67, %v348
  %v437 = vadd.f32 %v68, %v353
  %v438 = vadd.f32 %v69, %v356
  %v439 = vadd.f32 %v70, %v361
  %v440 = vadd.f32 %v71, %v364
  %v441 = vadd.f32 %v72, %v369
  %v442 = vadd.f32 %v73, %v372
  %v443 = vadd.f32 %v74, %v377
  %v444 = vadd.f32 %v75, %v380
  %v445 = vadd.f32 %v76, %v385
  %v446 = vadd.f32 %v77, %v388
  %v447 = vadd.f32 %v78, %v393
  %v448 = vadd.f32 %v79, %v396
  %v449 = vadd.f32 %v80, %v401
  %v450 = vadd.f32 %v81, %v404
  %v451 = vadd.f32 %v82, %v409
  %v452 = vadd.f32 %v83, %v412
  %v453 = vadd.f32 %v84, %v417
  %v454 = vadd.f32 %v85, %v420
  %455 = vst [vmem:[#allocation2] sm:$0xff] %v423
  %456 = vst [vmem:[#allocation2 + $0x8] sm:$0xff] %v424
  %457 = vst [vmem:[#allocation2 + $0x10] sm:$0xff] %v425
  %458 = vst [vmem:[#allocation2 + $0x18] sm:$0xff] %v426
  %459 = vst [vmem:[#allocation2 + $0x20] sm:$0xff] %v427
  %460 = vst [vmem:[#allocation2 + $0x28] sm:$0xff] %v428
  %461 = vst [vmem:[#allocation2 + $0x30] sm:$0xff] %v429
  %462 = vst [vmem:[#allocation2 + $0x38] sm:$0xff] %v430
  %463 = vst [vmem:[#allocation2 + $0x40] sm:$0xff] %v431
  %464 = vst [vmem:[#allocation2 + $0x48] sm:$0xff] %v432
  %465 = vst [vmem:[#allocation2 + $0x50] sm:$0xff] %v433
  %466 = vst [vmem:[#allocation2 + $0x58] sm:$0xff] %v434
  %467 = vst [vmem:[#allocation2 + $0x60] sm:$0xff] %v435
  %468 = vst [vmem:[#allocation2 + $0x68] sm:$0xff] %v436
  %469 = vst [vmem:[#allocation2 + $0x70] sm:$0xff] %v437
  %470 = vst [vmem:[#allocation2 + $0x78] sm:$0xff] %v438
  %471 = vst [vmem:[#allocation2 + $0x80] sm:$0xff] %v439
  %472 = vst [vmem:[#allocation2 + $0x88] sm:$0xff] %v440
  %473 = vst [vmem:[#allocation2 + $0x90] sm:$0xff] %v441
  %474 = vst [vmem:[#allocation2 + $0x98] sm:$0xff] %v442
  %475 = vst [vmem:[#allocation2 + $0xa0] sm:$0xff] %v443
  %476 = vst [vmem:[#allocation2 + $0xa8] sm:$0xff] %v444
  %477 = vst [vmem:[#allocation2 + $0xb0] sm:$0xff] %v445
  %478 = vst [vmem:[#allocation2 + $0xb8] sm:$0xff] %v446
  %479 = vst [vmem:[#allocation2 + $0xc0] sm:$0xff] %v447
  %480 = vst [vmem:[#allocation2 + $0xc8] sm:$0xff] %v448
  %481 = vst [vmem:[#allocation2 + $0xd0] sm:$0xff] %v449
  %482 = vst [vmem:[#allocation2 + $0xd8] sm:$0xff] %v450
  %483 = vst [vmem:[#allocation2 + $0xe0] sm:$0xff] %v451
  %484 = vst [vmem:[#allocation2 + $0xe8] sm:$0xff] %v452
  %485 = vst [vmem:[#allocation2 + $0xf0] sm:$0xff] %v453
  %486 = vst [vmem:[#allocation2 + $0xf8] sm:$0xff] %v454
  // Predicated region
  $region22: #{graphsage_forward.3} parent=0 // pred_check
    %p487 = pneg %p18
  $region23: #{graphsage_forward.3} parent=0 // pred_check_branch
    %489 = sbr.rel (%p487) target = $region25
  $region24: #{graphsage_forward.3} parent=0 // pred_region
    %v490 = vld [vmem:[#allocation2] sm:$0xff]
    %v491 = vld [vmem:[#allocation2 + $0x8] sm:$0xff]
    %v492 = vld [vmem:[#allocation2 + $0x10] sm:$0xff]
    %v493 = vld [vmem:[#allocation2 + $0x18] sm:$0xff]
    %v494 = vld [vmem:[#allocation2 + $0x20] sm:$0xff]
    %v495 = vld [vmem:[#allocation2 + $0x28] sm:$0xff]
    %v496 = vld [vmem:[#allocation2 + $0x30] sm:$0xff]
    %v497 = vld [vmem:[#allocation2 + $0x38] sm:$0xff]
    %v498 = vld [vmem:[#allocation2 + $0x40] sm:$0xff]
    %v499 = vld [vmem:[#allocation2 + $0x48] sm:$0xff]
    %v500 = vld [vmem:[#allocation2 + $0x50] sm:$0xff]
    %v501 = vld [vmem:[#allocation2 + $0x58] sm:$0xff]
    %v502 = vld [vmem:[#allocation2 + $0x60] sm:$0xff]
    %v503 = vld [vmem:[#allocation2 + $0x68] sm:$0xff]
    %v504 = vld [vmem:[#allocation2 + $0x70] sm:$0xff]
    %v505 = vld [vmem:[#allocation2 + $0x78] sm:$0xff]
    %v506 = vld [vmem:[#allocation2 + $0x80] sm:$0xff]
    %v507 = vld [vmem:[#allocation2 + $0x88] sm:$0xff]
    %v508 = vld [vmem:[#allocation2 + $0x90] sm:$0xff]
    %v509 = vld [vmem:[#allocation2 + $0x98] sm:$0xff]
    %v510 = vld [vmem:[#allocation2 + $0xa0] sm:$0xff]
    %v511 = vld [vmem:[#allocation2 + $0xa8] sm:$0xff]
    %v512 = vld [vmem:[#allocation2 + $0xb0] sm:$0xff]
    %v513 = vld [vmem:[#allocation2 + $0xb8] sm:$0xff]
    %v514 = vld [vmem:[#allocation2 + $0xc0] sm:$0xff]
    %v515 = vld [vmem:[#allocation2 + $0xc8] sm:$0xff]
    %v516 = vld [vmem:[#allocation2 + $0xd0] sm:$0xff]
    %v517 = vld [vmem:[#allocation2 + $0xd8] sm:$0xff]
    %v518 = vld [vmem:[#allocation2 + $0xe0] sm:$0xff]
    %v519 = vld [vmem:[#allocation2 + $0xe8] sm:$0xff]
    %v520 = vld [vmem:[#allocation2 + $0xf0] sm:$0xff]
    %v521 = vld [vmem:[#allocation2 + $0xf8] sm:$0xff]
    %v522 = vld [vmem:[%s2] sm:$0xf]
    %v523 = vld [vmem:[%s2 + $0x4] sm:$0xf]
    %v524 = vld [vmem:[%s2 + $0x8] sm:$0xf]
    %v525 = vld [vmem:[%s2 + $0xc] sm:$0xf]
    %v526 = vld [vmem:[%s2 + $0x10] sm:$0xf]
    %v527 = vld [vmem:[%s2 + $0x14] sm:$0xf]
    %v528 = vld [vmem:[%s2 + $0x18] sm:$0xf]
    %v529 = vld [vmem:[%s2 + $0x1c] sm:$0xf]
    %v530 = vld [vmem:[%s2 + $0x20] sm:$0xf]
    %v531 = vld [vmem:[%s2 + $0x24] sm:$0xf]
    %v532 = vld [vmem:[%s2 + $0x28] sm:$0xf]
    %v533 = vld [vmem:[%s2 + $0x2c] sm:$0xf]
    %v534 = vld [vmem:[%s2 + $0x30] sm:$0xf]
    %v535 = vld [vmem:[%s2 + $0x34] sm:$0xf]
    %v536 = vld [vmem:[%s2 + $0x38] sm:$0xf]
    %v537 = vld [vmem:[%s2 + $0x3c] sm:$0xf]
    %v538 = vld [vmem:[%s2 + $0x40] sm:$0xf]
    %v539 = vld [vmem:[%s2 + $0x44] sm:$0xf]
    %v540 = vld [vmem:[%s2 + $0x48] sm:$0xf]
    %v541 = vld [vmem:[%s2 + $0x4c] sm:$0xf]
    %v542 = vld [vmem:[%s2 + $0x50] sm:$0xf]
    %v543 = vld [vmem:[%s2 + $0x54] sm:$0xf]
    %v544 = vld [vmem:[%s2 + $0x58] sm:$0xf]
    %v545 = vld [vmem:[%s2 + $0x5c] sm:$0xf]
    %v546 = vld [vmem:[%s2 + $0x60] sm:$0xf]
    %v547 = vld [vmem:[%s2 + $0x64] sm:$0xf]
    %v548 = vld [vmem:[%s2 + $0x68] sm:$0xf]
    %v549 = vld [vmem:[%s2 + $0x6c] sm:$0xf]
    %v550 = vld [vmem:[%s2 + $0x70] sm:$0xf]
    %v551 = vld [vmem:[%s2 + $0x74] sm:$0xf]
    %v552 = vld [vmem:[%s2 + $0x78] sm:$0xf]
    %v553 = vld [vmem:[%s2 + $0x7c] sm:$0xf]
    %v554 = vunpack.c.l.bf16 %v522
    %v555 = vunpack.c.l.bf16 %v523
    %v556 = vunpack.c.l.bf16 %v524
    %v557 = vunpack.c.l.bf16 %v525
    %v558 = vunpack.c.l.bf16 %v526
    %v559 = vunpack.c.l.bf16 %v527
    %v560 = vunpack.c.l.bf16 %v528
    %v561 = vunpack.c.l.bf16 %v529
    %v562 = vunpack.c.l.bf16 %v530
    %v563 = vunpack.c.l.bf16 %v531
    %v564 = vunpack.c.l.bf16 %v532
    %v565 = vunpack.c.l.bf16 %v533
    %v566 = vunpack.c.l.bf16 %v534
    %v567 = vunpack.c.l.bf16 %v535
    %v568 = vunpack.c.l.bf16 %v536
    %v569 = vunpack.c.l.bf16 %v537
    %v570 = vunpack.c.l.bf16 %v538
    %v571 = vunpack.c.l.bf16 %v539
    %v572 = vunpack.c.l.bf16 %v540
    %v573 = vunpack.c.l.bf16 %v541
    %v574 = vunpack.c.l.bf16 %v542
    %v575 = vunpack.c.l.bf16 %v543
    %v576 = vunpack.c.l.bf16 %v544
    %v577 = vunpack.c.l.bf16 %v545
    %v578 = vunpack.c.l.bf16 %v546
    %v579 = vunpack.c.l.bf16 %v547
    %v580 = vunpack.c.l.bf16 %v548
    %v581 = vunpack.c.l.bf16 %v549
    %v582 = vunpack.c.l.bf16 %v550
    %v583 = vunpack.c.l.bf16 %v551
    %v584 = vunpack.c.l.bf16 %v552
    %v585 = vunpack.c.l.bf16 %v553
    %v586 = vadd.f32 %v490, %v554
    %v587 = vadd.f32 %v491, %v555
    %v588 = vadd.f32 %v492, %v556
    %v589 = vadd.f32 %v493, %v557
    %v590 = vadd.f32 %v494, %v558
    %v591 = vadd.f32 %v495, %v559
    %v592 = vadd.f32 %v496, %v560
    %v593 = vadd.f32 %v497, %v561
    %v594 = vadd.f32 %v498, %v562
    %v595 = vadd.f32 %v499, %v563
    %v596 = vadd.f32 %v500, %v564
    %v597 = vadd.f32 %v501, %v565
    %v598 = vadd.f32 %v502, %v566
    %v599 = vadd.f32 %v503, %v567
    %v600 = vadd.f32 %v504, %v568
    %v601 = vadd.f32 %v505, %v569
    %v602 = vadd.f32 %v506, %v570
    %v603 = vadd.f32 %v507, %v571
    %v604 = vadd.f32 %v508, %v572
    %v605 = vadd.f32 %v509, %v573
    %v606 = vadd.f32 %v510, %v574
    %v607 = vadd.f32 %v511, %v575
    %v608 = vadd.f32 %v512, %v576
    %v609 = vadd.f32 %v513, %v577
    %v610 = vadd.f32 %v514, %v578
    %v611 = vadd.f32 %v515, %v579
    %v612 = vadd.f32 %v516, %v580
    %v613 = vadd.f32 %v517, %v581
    %v614 = vadd.f32 %v518, %v582
    %v615 = vadd.f32 %v519, %v583
    %v616 = vadd.f32 %v520, %v584
    %v617 = vadd.f32 %v521, %v585
    %v618 = vld [vmem:[%s3] sm:$0x1]
    %v620 = vlaneseq
    %v621 = vshrl.u32 %v620, 7
    %v622 = vsub.s32 0, %v621
    %v623 = vrot.slane %v618, %v622
    %v625 = vadd.f32 %v586, %v623
    %v626 = vadd.f32 %v587, %v623
    %v627 = vadd.f32 %v588, %v623
    %v628 = vadd.f32 %v589, %v623
    %v629 = vadd.f32 %v590, %v623
    %v630 = vadd.f32 %v591, %v623
    %v631 = vadd.f32 %v592, %v623
    %v632 = vadd.f32 %v593, %v623
    %v633 = vadd.f32 %v594, %v623
    %v634 = vadd.f32 %v595, %v623
    %v635 = vadd.f32 %v596, %v623
    %v636 = vadd.f32 %v597, %v623
    %v637 = vadd.f32 %v598, %v623
    %v638 = vadd.f32 %v599, %v623
    %v639 = vadd.f32 %v600, %v623
    %v640 = vadd.f32 %v601, %v623
    %v641 = vadd.f32 %v602, %v623
    %v642 = vadd.f32 %v603, %v623
    %v643 = vadd.f32 %v604, %v623
    %v644 = vadd.f32 %v605, %v623
    %v645 = vadd.f32 %v606, %v623
    %v646 = vadd.f32 %v607, %v623
    %v647 = vadd.f32 %v608, %v623
    %v648 = vadd.f32 %v609, %v623
    %v649 = vadd.f32 %v610, %v623
    %v650 = vadd.f32 %v611, %v623
    %v651 = vadd.f32 %v612, %v623
    %v652 = vadd.f32 %v613, %v623
    %v653 = vadd.f32 %v614, %v623
    %v654 = vadd.f32 %v615, %v623
    %v655 = vadd.f32 %v616, %v623
    %v656 = vadd.f32 %v617, %v623
    %v657 = vlaneseq
    %v658 = vand.u32 %v657, 127
    %vm659 = vcmp.lt.s32.totalorder %v658, 4
    %v660 = vsel %vm659, %v625, -inf
    %v661 = vsel %vm659, %v626, -inf
    %v662 = vsel %vm659, %v627, -inf
    %v663 = vsel %vm659, %v628, -inf
    %v664 = vsel %vm659, %v629, -inf
    %v665 = vsel %vm659, %v630, -inf
    %v666 = vsel %vm659, %v631, -inf
    %v667 = vsel %vm659, %v632, -inf
    %v668 = vsel %vm659, %v633, -inf
    %v669 = vsel %vm659, %v634, -inf
    %v670 = vsel %vm659, %v635, -inf
    %v671 = vsel %vm659, %v636, -inf
    %v672 = vsel %vm659, %v637, -inf
    %v673 = vsel %vm659, %v638, -inf
    %v674 = vsel %vm659, %v639, -inf
    %v675 = vsel %vm659, %v640, -inf
    %v676 = vsel %vm659, %v641, -inf
    %v677 = vsel %vm659, %v642, -inf
    %v678 = vsel %vm659, %v643, -inf
    %v679 = vsel %vm659, %v644, -inf
    %v680 = vsel %vm659, %v645, -inf
    %v681 = vsel %vm659, %v646, -inf
    %v682 = vsel %vm659, %v647, -inf
    %v683 = vsel %vm659, %v648, -inf
    %v684 = vsel %vm659, %v649, -inf
    %v685 = vsel %vm659, %v650, -inf
    %v686 = vsel %vm659, %v651, -inf
    %v687 = vsel %vm659, %v652, -inf
    %v688 = vsel %vm659, %v653, -inf
    %v689 = vsel %vm659, %v654, -inf
    %v690 = vsel %vm659, %v655, -inf
    %v691 = vsel %vm659, %v656, -inf
    %692 = vmax.xlane.f32.xlu0 %v660
    %v693 = vpop.xlane.xlu0 %692
    %694 = vmax.xlane.f32.xlu0 %v661
    %v695 = vpop.xlane.xlu0 %694
    %696 = vmax.xlane.f32.xlu0 %v662
    %v697 = vpop.xlane.xlu0 %696
    %698 = vmax.xlane.f32.xlu0 %v663
    %v699 = vpop.xlane.xlu0 %698
    %700 = vmax.xlane.f32.xlu0 %v664
    %v701 = vpop.xlane.xlu0 %700
    %702 = vmax.xlane.f32.xlu0 %v665
    %v703 = vpop.xlane.xlu0 %702
    %704 = vmax.xlane.f32.xlu0 %v666
    %v705 = vpop.xlane.xlu0 %704
    %706 = vmax.xlane.f32.xlu0 %v667
    %v707 = vpop.xlane.xlu0 %706
    %708 = vmax.xlane.f32.xlu0 %v668
    %v709 = vpop.xlane.xlu0 %708
    %710 = vmax.xlane.f32.xlu0 %v669
    %v711 = vpop.xlane.xlu0 %710
    %712 = vmax.xlane.f32.xlu0 %v670
    %v713 = vpop.xlane.xlu0 %712
    %714 = vmax.xlane.f32.xlu0 %v671
    %v715 = vpop.xlane.xlu0 %714
    %716 = vmax.xlane.f32.xlu0 %v672
    %v717 = vpop.xlane.xlu0 %716
    %718 = vmax.xlane.f32.xlu0 %v673
    %v719 = vpop.xlane.xlu0 %718
    %720 = vmax.xlane.f32.xlu0 %v674
    %v721 = vpop.xlane.xlu0 %720
    %722 = vmax.xlane.f32.xlu0 %v675
    %v723 = vpop.xlane.xlu0 %722
    %724 = vmax.xlane.f32.xlu0 %v676
    %v725 = vpop.xlane.xlu0 %724
    %726 = vmax.xlane.f32.xlu0 %v677
    %v727 = vpop.xlane.xlu0 %726
    %728 = vmax.xlane.f32.xlu0 %v678
    %v729 = vpop.xlane.xlu0 %728
    %730 = vmax.xlane.f32.xlu0 %v679
    %v731 = vpop.xlane.xlu0 %730
    %732 = vmax.xlane.f32.xlu0 %v680
    %v733 = vpop.xlane.xlu0 %732
    %734 = vmax.xlane.f32.xlu0 %v681
    %v735 = vpop.xlane.xlu0 %734
    %736 = vmax.xlane.f32.xlu0 %v682
    %v737 = vpop.xlane.xlu0 %736
    %738 = vmax.xlane.f32.xlu0 %v683
    %v739 = vpop.xlane.xlu0 %738
    %740 = vmax.xlane.f32.xlu0 %v684
    %v741 = vpop.xlane.xlu0 %740
    %742 = vmax.xlane.f32.xlu0 %v685
    %v743 = vpop.xlane.xlu0 %742
    %744 = vmax.xlane.f32.xlu0 %v686
    %v745 = vpop.xlane.xlu0 %744
    %746 = vmax.xlane.f32.xlu0 %v687
    %v747 = vpop.xlane.xlu0 %746
    %748 = vmax.xlane.f32.xlu0 %v688
    %v749 = vpop.xlane.xlu0 %748
    %750 = vmax.xlane.f32.xlu0 %v689
    %v751 = vpop.xlane.xlu0 %750
    %752 = vmax.xlane.f32.xlu0 %v690
    %v753 = vpop.xlane.xlu0 %752
    %754 = vmax.xlane.f32.xlu0 %v691
    %v755 = vpop.xlane.xlu0 %754
    %v756 = vsub.f32 %v660, %v693
    %v757 = vsub.f32 %v661, %v695
    %v758 = vsub.f32 %v662, %v697
    %v759 = vsub.f32 %v663, %v699
    %v760 = vsub.f32 %v664, %v701
    %v761 = vsub.f32 %v665, %v703
    %v762 = vsub.f32 %v666, %v705
    %v763 = vsub.f32 %v667, %v707
    %v764 = vsub.f32 %v668, %v709
    %v765 = vsub.f32 %v669, %v711
    %v766 = vsub.f32 %v670, %v713
    %v767 = vsub.f32 %v671, %v715
    %v768 = vsub.f32 %v672, %v717
    %v769 = vsub.f32 %v673, %v719
    %v770 = vsub.f32 %v674, %v721
    %v771 = vsub.f32 %v675, %v723
    %v772 = vsub.f32 %v676, %v725
    %v773 = vsub.f32 %v677, %v727
    %v774 = vsub.f32 %v678, %v729
    %v775 = vsub.f32 %v679, %v731
    %v776 = vsub.f32 %v680, %v733
    %v777 = vsub.f32 %v681, %v735
    %v778 = vsub.f32 %v682, %v737
    %v779 = vsub.f32 %v683, %v739
    %v780 = vsub.f32 %v684, %v741
    %v781 = vsub.f32 %v685, %v743
    %v782 = vsub.f32 %v686, %v745
    %v783 = vsub.f32 %v687, %v747
    %v784 = vsub.f32 %v688, %v749
    %v785 = vsub.f32 %v689, %v751
    %v786 = vsub.f32 %v690, %v753
    %v787 = vsub.f32 %v691, %v755
    %v788 = vmul.f32 %v756, 1.442695
    %v789 = vpow.pop %v788
    %v790 = vmul.f32 %v757, 1.442695
    %v791 = vpow.pop %v790
    %v792 = vmul.f32 %v758, 1.442695
    %v793 = vpow.pop %v792
    %v794 = vmul.f32 %v759, 1.442695
    %v795 = vpow.pop %v794
    %v796 = vmul.f32 %v760, 1.442695
    %v797 = vpow.pop %v796
    %v798 = vmul.f32 %v761, 1.442695
    %v799 = vpow.pop %v798
    %v800 = vmul.f32 %v762, 1.442695
    %v801 = vpow.pop %v800
    %v802 = vmul.f32 %v763, 1.442695
    %v803 = vpow.pop %v802
    %v804 = vmul.f32 %v764, 1.442695
    %v805 = vpow.pop %v804
    %v806 = vmul.f32 %v765, 1.442695
    %v807 = vpow.pop %v806
    %v808 = vmul.f32 %v766, 1.442695
    %v809 = vpow.pop %v808
    %v810 = vmul.f32 %v767, 1.442695
    %v811 = vpow.pop %v810
    %v812 = vmul.f32 %v768, 1.442695
    %v813 = vpow.pop %v812
    %v814 = vmul.f32 %v769, 1.442695
    %v815 = vpow.pop %v814
    %v816 = vmul.f32 %v770, 1.442695
    %v817 = vpow.pop %v816
    %v818 = vmul.f32 %v771, 1.442695
    %v819 = vpow.pop %v818
    %v820 = vmul.f32 %v772, 1.442695
    %v821 = vpow.pop %v820
    %v822 = vmul.f32 %v773, 1.442695
    %v823 = vpow.pop %v822
    %v824 = vmul.f32 %v774, 1.442695
    %v825 = vpow.pop %v824
    %v826 = vmul.f32 %v775, 1.442695
    %v827 = vpow.pop %v826
    %v828 = vmul.f32 %v776, 1.442695
    %v829 = vpow.pop %v828
    %v830 = vmul.f32 %v777, 1.442695
    %v831 = vpow.pop %v830
    %v832 = vmul.f32 %v778, 1.442695
    %v833 = vpow.pop %v832
    %v834 = vmul.f32 %v779, 1.442695
    %v835 = vpow.pop %v834
    %v836 = vmul.f32 %v780, 1.442695
    %v837 = vpow.pop %v836
    %v838 = vmul.f32 %v781, 1.442695
    %v839 = vpow.pop %v838
    %v840 = vmul.f32 %v782, 1.442695
    %v841 = vpow.pop %v840
    %v842 = vmul.f32 %v783, 1.442695
    %v843 = vpow.pop %v842
    %v844 = vmul.f32 %v784, 1.442695
    %v845 = vpow.pop %v844
    %v846 = vmul.f32 %v785, 1.442695
    %v847 = vpow.pop %v846
    %v848 = vmul.f32 %v786, 1.442695
    %v849 = vpow.pop %v848
    %v850 = vmul.f32 %v787, 1.442695
    %v851 = vpow.pop %v850
    %852 = vadd.xlane.f32.xlu0 %v789
    %v853 = vpop.xlane.xlu0 %852
    %854 = vadd.xlane.f32.xlu0 %v791
    %v855 = vpop.xlane.xlu0 %854
    %856 = vadd.xlane.f32.xlu0 %v793
    %v857 = vpop.xlane.xlu0 %856
    %858 = vadd.xlane.f32.xlu0 %v795
    %v859 = vpop.xlane.xlu0 %858
    %860 = vadd.xlane.f32.xlu0 %v797
    %v861 = vpop.xlane.xlu0 %860
    %862 = vadd.xlane.f32.xlu0 %v799
    %v863 = vpop.xlane.xlu0 %862
    %864 = vadd.xlane.f32.xlu0 %v801
    %v865 = vpop.xlane.xlu0 %864
    %866 = vadd.xlane.f32.xlu0 %v803
    %v867 = vpop.xlane.xlu0 %866
    %868 = vadd.xlane.f32.xlu0 %v805
    %v869 = vpop.xlane.xlu0 %868
    %870 = vadd.xlane.f32.xlu0 %v807
    %v871 = vpop.xlane.xlu0 %870
    %872 = vadd.xlane.f32.xlu0 %v809
    %v873 = vpop.xlane.xlu0 %872
    %874 = vadd.xlane.f32.xlu0 %v811
    %v875 = vpop.xlane.xlu0 %874
    %876 = vadd.xlane.f32.xlu0 %v813
    %v877 = vpop.xlane.xlu0 %876
    %878 = vadd.xlane.f32.xlu0 %v815
    %v879 = vpop.xlane.xlu0 %878
    %880 = vadd.xlane.f32.xlu0 %v817
    %v881 = vpop.xlane.xlu0 %880
    %882 = vadd.xlane.f32.xlu0 %v819
    %v883 = vpop.xlane.xlu0 %882
    %884 = vadd.xlane.f32.xlu0 %v821
    %v885 = vpop.xlane.xlu0 %884
    %886 = vadd.xlane.f32.xlu0 %v823
    %v887 = vpop.xlane.xlu0 %886
    %888 = vadd.xlane.f32.xlu0 %v825
    %v889 = vpop.xlane.xlu0 %888
    %890 = vadd.xlane.f32.xlu0 %v827
    %v891 = vpop.xlane.xlu0 %890
    %892 = vadd.xlane.f32.xlu0 %v829
    %v893 = vpop.xlane.xlu0 %892
    %894 = vadd.xlane.f32.xlu0 %v831
    %v895 = vpop.xlane.xlu0 %894
    %896 = vadd.xlane.f32.xlu0 %v833
    %v897 = vpop.xlane.xlu0 %896
    %898 = vadd.xlane.f32.xlu0 %v835
    %v899 = vpop.xlane.xlu0 %898
    %900 = vadd.xlane.f32.xlu0 %v837
    %v901 = vpop.xlane.xlu0 %900
    %902 = vadd.xlane.f32.xlu0 %v839
    %v903 = vpop.xlane.xlu0 %902
    %904 = vadd.xlane.f32.xlu0 %v841
    %v905 = vpop.xlane.xlu0 %904
    %906 = vadd.xlane.f32.xlu0 %v843
    %v907 = vpop.xlane.xlu0 %906
    %908 = vadd.xlane.f32.xlu0 %v845
    %v909 = vpop.xlane.xlu0 %908
    %910 = vadd.xlane.f32.xlu0 %v847
    %v911 = vpop.xlane.xlu0 %910
    %912 = vadd.xlane.f32.xlu0 %v849
    %v913 = vpop.xlane.xlu0 %912
    %914 = vadd.xlane.f32.xlu0 %v851
    %v915 = vpop.xlane.xlu0 %914
    %v916 = vlog2.pop %v853
    %v917 = vmul.f32 %v916, 0.6931472
    %v918 = vlog2.pop %v855
    %v919 = vmul.f32 %v918, 0.6931472
    %v920 = vlog2.pop %v857
    %v921 = vmul.f32 %v920, 0.6931472
    %v922 = vlog2.pop %v859
    %v923 = vmul.f32 %v922, 0.6931472
    %v924 = vlog2.pop %v861
    %v925 = vmul.f32 %v924, 0.6931472
    %v926 = vlog2.pop %v863
    %v927 = vmul.f32 %v926, 0.6931472
    %v928 = vlog2.pop %v865
    %v929 = vmul.f32 %v928, 0.6931472
    %v930 = vlog2.pop %v867
    %v931 = vmul.f32 %v930, 0.6931472
    %v932 = vlog2.pop %v869
    %v933 = vmul.f32 %v932, 0.6931472
    %v934 = vlog2.pop %v871
    %v935 = vmul.f32 %v934, 0.6931472
    %v936 = vlog2.pop %v873
    %v937 = vmul.f32 %v936, 0.6931472
    %v938 = vlog2.pop %v875
    %v939 = vmul.f32 %v938, 0.6931472
    %v940 = vlog2.pop %v877
    %v941 = vmul.f32 %v940, 0.6931472
    %v942 = vlog2.pop %v879
    %v943 = vmul.f32 %v942, 0.6931472
    %v944 = vlog2.pop %v881
    %v945 = vmul.f32 %v944, 0.6931472
    %v946 = vlog2.pop %v883
    %v947 = vmul.f32 %v946, 0.6931472
    %v948 = vlog2.pop %v885
    %v949 = vmul.f32 %v948, 0.6931472
    %v950 = vlog2.pop %v887
    %v951 = vmul.f32 %v950, 0.6931472
    %v952 = vlog2.pop %v889
    %v953 = vmul.f32 %v952, 0.6931472
    %v954 = vlog2.pop %v891
    %v955 = vmul.f32 %v954, 0.6931472
    %v956 = vlog2.pop %v893
    %v957 = vmul.f32 %v956, 0.6931472
    %v958 = vlog2.pop %v895
    %v959 = vmul.f32 %v958, 0.6931472
    %v960 = vlog2.pop %v897
    %v961 = vmul.f32 %v960, 0.6931472
    %v962 = vlog2.pop %v899
    %v963 = vmul.f32 %v962, 0.6931472
    %v964 = vlog2.pop %v901
    %v965 = vmul.f32 %v964, 0.6931472
    %v966 = vlog2.pop %v903
    %v967 = vmul.f32 %v966, 0.6931472
    %v968 = vlog2.pop %v905
    %v969 = vmul.f32 %v968, 0.6931472
    %v970 = vlog2.pop %v907
    %v971 = vmul.f32 %v970, 0.6931472
    %v972 = vlog2.pop %v909
    %v973 = vmul.f32 %v972, 0.6931472
    %v974 = vlog2.pop %v911
    %v975 = vmul.f32 %v974, 0.6931472
    %v976 = vlog2.pop %v913
    %v977 = vmul.f32 %v976, 0.6931472
    %v978 = vlog2.pop %v915
    %v979 = vmul.f32 %v978, 0.6931472
    %v980 = vadd.f32 %v693, %v917
    %v981 = vadd.f32 %v695, %v919
    %v982 = vadd.f32 %v697, %v921
    %v983 = vadd.f32 %v699, %v923
    %v984 = vadd.f32 %v701, %v925
    %v985 = vadd.f32 %v703, %v927
    %v986 = vadd.f32 %v705, %v929
    %v987 = vadd.f32 %v707, %v931
    %v988 = vadd.f32 %v709, %v933
    %v989 = vadd.f32 %v711, %v935
    %v990 = vadd.f32 %v713, %v937
    %v991 = vadd.f32 %v715, %v939
    %v992 = vadd.f32 %v717, %v941
    %v993 = vadd.f32 %v719, %v943
    %v994 = vadd.f32 %v721, %v945
    %v995 = vadd.f32 %v723, %v947
    %v996 = vadd.f32 %v725, %v949
    %v997 = vadd.f32 %v727, %v951
    %v998 = vadd.f32 %v729, %v953
    %v999 = vadd.f32 %v731, %v955
    %v1000 = vadd.f32 %v733, %v957
    %v1001 = vadd.f32 %v735, %v959
    %v1002 = vadd.f32 %v737, %v961
    %v1003 = vadd.f32 %v739, %v963
    %v1004 = vadd.f32 %v741, %v965
    %v1005 = vadd.f32 %v743, %v967
    %v1006 = vadd.f32 %v745, %v969
    %v1007 = vadd.f32 %v747, %v971
    %v1008 = vadd.f32 %v749, %v973
    %v1009 = vadd.f32 %v751, %v975
    %v1010 = vadd.f32 %v753, %v977
    %v1011 = vadd.f32 %v755, %v979
    %v1012 = vsub.f32 %v625, %v980
    %v1013 = vsub.f32 %v626, %v981
    %v1014 = vsub.f32 %v627, %v982
    %v1015 = vsub.f32 %v628, %v983
    %v1016 = vsub.f32 %v629, %v984
    %v1017 = vsub.f32 %v630, %v985
    %v1018 = vsub.f32 %v631, %v986
    %v1019 = vsub.f32 %v632, %v987
    %v1020 = vsub.f32 %v633, %v988
    %v1021 = vsub.f32 %v634, %v989
    %v1022 = vsub.f32 %v635, %v990
    %v1023 = vsub.f32 %v636, %v991
    %v1024 = vsub.f32 %v637, %v992
    %v1025 = vsub.f32 %v638, %v993
    %v1026 = vsub.f32 %v639, %v994
    %v1027 = vsub.f32 %v640, %v995
    %v1028 = vsub.f32 %v641, %v996
    %v1029 = vsub.f32 %v642, %v997
    %v1030 = vsub.f32 %v643, %v998
    %v1031 = vsub.f32 %v644, %v999
    %v1032 = vsub.f32 %v645, %v1000
    %v1033 = vsub.f32 %v646, %v1001
    %v1034 = vsub.f32 %v647, %v1002
    %v1035 = vsub.f32 %v648, %v1003
    %v1036 = vsub.f32 %v649, %v1004
    %v1037 = vsub.f32 %v650, %v1005
    %v1038 = vsub.f32 %v651, %v1006
    %v1039 = vsub.f32 %v652, %v1007
    %v1040 = vsub.f32 %v653, %v1008
    %v1041 = vsub.f32 %v654, %v1009
    %v1042 = vsub.f32 %v655, %v1010
    %v1043 = vsub.f32 %v656, %v1011
    %v1044 = vsel %vm659, %v1012, 0.0
    %v1045 = vsel %vm659, %v1013, 0.0
    %v1046 = vsel %vm659, %v1014, 0.0
    %v1047 = vsel %vm659, %v1015, 0.0
    %v1048 = vsel %vm659, %v1016, 0.0
    %v1049 = vsel %vm659, %v1017, 0.0
    %v1050 = vsel %vm659, %v1018, 0.0
    %v1051 = vsel %vm659, %v1019, 0.0
    %v1052 = vsel %vm659, %v1020, 0.0
    %v1053 = vsel %vm659, %v1021, 0.0
    %v1054 = vsel %vm659, %v1022, 0.0
    %v1055 = vsel %vm659, %v1023, 0.0
    %v1056 = vsel %vm659, %v1024, 0.0
    %v1057 = vsel %vm659, %v1025, 0.0
    %v1058 = vsel %vm659, %v1026, 0.0
    %v1059 = vsel %vm659, %v1027, 0.0
    %v1060 = vsel %vm659, %v1028, 0.0
    %v1061 = vsel %vm659, %v1029, 0.0
    %v1062 = vsel %vm659, %v1030, 0.0
    %v1063 = vsel %vm659, %v1031, 0.0
    %v1064 = vsel %vm659, %v1032, 0.0
    %v1065 = vsel %vm659, %v1033, 0.0
    %v1066 = vsel %vm659, %v1034, 0.0
    %v1067 = vsel %vm659, %v1035, 0.0
    %v1068 = vsel %vm659, %v1036, 0.0
    %v1069 = vsel %vm659, %v1037, 0.0
    %v1070 = vsel %vm659, %v1038, 0.0
    %v1071 = vsel %vm659, %v1039, 0.0
    %v1072 = vsel %vm659, %v1040, 0.0
    %v1073 = vsel %vm659, %v1041, 0.0
    %v1074 = vsel %vm659, %v1042, 0.0
    %v1075 = vsel %vm659, %v1043, 0.0
    %1076 = vst [vmem:[%s4] sm:$0xff] %v1044
    %1077 = vst [vmem:[%s4 + $0x8] sm:$0xff] %v1045
    %1078 = vst [vmem:[%s4 + $0x10] sm:$0xff] %v1046
    %1079 = vst [vmem:[%s4 + $0x18] sm:$0xff] %v1047
    %1080 = vst [vmem:[%s4 + $0x20] sm:$0xff] %v1048
    %1081 = vst [vmem:[%s4 + $0x28] sm:$0xff] %v1049
    %1082 = vst [vmem:[%s4 + $0x30] sm:$0xff] %v1050
    %1083 = vst [vmem:[%s4 + $0x38] sm:$0xff] %v1051
    %1084 = vst [vmem:[%s4 + $0x40] sm:$0xff] %v1052
    %1085 = vst [vmem:[%s4 + $0x48] sm:$0xff] %v1053
    %1086 = vst [vmem:[%s4 + $0x50] sm:$0xff] %v1054
    %1087 = vst [vmem:[%s4 + $0x58] sm:$0xff] %v1055
    %1088 = vst [vmem:[%s4 + $0x60] sm:$0xff] %v1056
    %1089 = vst [vmem:[%s4 + $0x68] sm:$0xff] %v1057
    %1090 = vst [vmem:[%s4 + $0x70] sm:$0xff] %v1058
    %1091 = vst [vmem:[%s4 + $0x78] sm:$0xff] %v1059
    %1092 = vst [vmem:[%s4 + $0x80] sm:$0xff] %v1060
    %1093 = vst [vmem:[%s4 + $0x88] sm:$0xff] %v1061
    %1094 = vst [vmem:[%s4 + $0x90] sm:$0xff] %v1062
    %1095 = vst [vmem:[%s4 + $0x98] sm:$0xff] %v1063
    %1096 = vst [vmem:[%s4 + $0xa0] sm:$0xff] %v1064
    %1097 = vst [vmem:[%s4 + $0xa8] sm:$0xff] %v1065
    %1098 = vst [vmem:[%s4 + $0xb0] sm:$0xff] %v1066
    %1099 = vst [vmem:[%s4 + $0xb8] sm:$0xff] %v1067
    %1100 = vst [vmem:[%s4 + $0xc0] sm:$0xff] %v1068
    %1101 = vst [vmem:[%s4 + $0xc8] sm:$0xff] %v1069
    %1102 = vst [vmem:[%s4 + $0xd0] sm:$0xff] %v1070
    %1103 = vst [vmem:[%s4 + $0xd8] sm:$0xff] %v1071
    %1104 = vst [vmem:[%s4 + $0xe0] sm:$0xff] %v1072
    %1105 = vst [vmem:[%s4 + $0xe8] sm:$0xff] %v1073
    %1106 = vst [vmem:[%s4 + $0xf0] sm:$0xff] %v1074
    %1107 = vst [vmem:[%s4 + $0xf8] sm:$0xff] %v1075
  $region25: #{graphsage_forward.3} parent=0 // pred_fallthru
    _
  // Predicated region
  $region26: #{graphsage_forward.3} parent=0 // pred_check
    _
  $region27: #{graphsage_forward.3} parent=0 // pred_check_branch
    %1109 = sbr.rel (0) target = $region29
  $region28: #{graphsage_forward.3} parent=0 // pred_region
    _
  $region29: #{graphsage_forward.3} parent=0 // pred_fallthru
    _
  // Predicated region
  $region30: #{graphsage_forward.3} parent=0 // pred_check
    _
  $region31: #{graphsage_forward.3} parent=0 // pred_check_branch
    %1111 = sbr.rel (0) target = $region33
  $region32: #{graphsage_forward.3} parent=0 // pred_region
    _
  $region33: #{graphsage_forward.3} parent=0 // pred_fallthru
    _

// kernel: graphsage_forward.2
$region0: #{graphsage_forward.2}
  #allocation0 [shape = 'u32[]', space=smem, size = 0x4, offset = 0x4, fixed_abs, tag = 'smem constant byte address 0x4 - core index']
  #allocation1 [shape = 'u32[144,128]{1,0:T(1,128)}', space=vmem, size = 0x12000, scoped, tag = 'internal scratch']
  #allocation2 [shape = 'f32[256,128]{1,0:T(8,128)}', space=vmem, size = 0x20000, scoped, tag = 'scratch operand']
  %s0 = inlined_call_operand.vmem [shape: s8[256,256], index: 0, kind: input, shape index: {}]
  %s1 = inlined_call_operand.vmem [shape: bf16[256,128], index: 1, kind: input, shape index: {}, may-alias: {1,2}]
  %s2 = inlined_call_operand.vmem [shape: bf16[256,128], index: 2, kind: input, shape index: {}, may-alias: {1,2}]
  %s3 = inlined_call_operand.vmem [shape: bf16[256,128], index: 3, kind: input, shape index: {}]
  %s4 = inlined_call_operand.vmem [shape: f32[1,128], index: 4, kind: input, shape index: {}]
  %s5 = inlined_call_operand.vmem [shape: bf16[128,256], index: 5, kind: input, shape index: {}]
  %s6 = inlined_call_operand.vmem [shape: bf16[256,128], index: 6, kind: output, shape index: {0}]
  %s7 = inlined_call_operand.vmem [shape: bf16[256,128], index: 7, kind: output, shape index: {1}]
  %8 = xla_tuple %s6, %s7
  %s9 = sld [smem:[#allocation0]]
  $region50: #{graphsage_forward.2} parent=0
    _
  %s11 = ssub.s32 1, %s9
  %s12 = scalar_select 0, %s11, %s9
  // Predicated region
  $region2: #{graphsage_forward.2} parent=0 // pred_check
    _
  $region3: #{graphsage_forward.2} parent=0 // pred_check_branch
    %14 = sbr.rel (0) target = $region5
  $region4: #{graphsage_forward.2} parent=0 // pred_region
    _
  $region5: #{graphsage_forward.2} parent=0 // pred_fallthru
    _
  // Predicated region
  $region6: #{graphsage_forward.2} parent=0 // pred_check
    _
  $region7: #{graphsage_forward.2} parent=0 // pred_check_branch
    %16 = sbr.rel (0) target = $region9
  $region8: #{graphsage_forward.2} parent=0 // pred_region
    _
  $region9: #{graphsage_forward.2} parent=0 // pred_fallthru
    _
  // Predicated region
  $region10: #{graphsage_forward.2} parent=0 // pred_check
    _
  $region11: #{graphsage_forward.2} parent=0 // pred_check_branch
    %18 = sbr.rel (0) target = $region13
  $region12: #{graphsage_forward.2} parent=0 // pred_region
    _
  $region13: #{graphsage_forward.2} parent=0 // pred_fallthru
    _
  // Predicated region
  $region14: #{graphsage_forward.2} parent=0 // pred_check
    _
  $region15: #{graphsage_forward.2} parent=0 // pred_check_branch
    %20 = sbr.rel (0) target = $region17
  $region16: #{graphsage_forward.2} parent=0 // pred_region
    _
  $region17: #{graphsage_forward.2} parent=0 // pred_fallthru
    _
  // Predicated region
  $region18: #{graphsage_forward.2} parent=0 // pred_check
    _
  $region19: #{graphsage_forward.2} parent=0 // pred_check_branch
    %22 = sbr.rel (0) target = $region21
  $region20: #{graphsage_forward.2} parent=0 // pred_region
    _
  $region21: #{graphsage_forward.2} parent=0 // pred_fallthru
    _
  // Predicated region
  $region22: #{graphsage_forward.2} parent=0 // pred_check
    _
  $region23: #{graphsage_forward.2} parent=0 // pred_check_branch
    %24 = sbr.rel (0) target = $region25
  $region24: #{graphsage_forward.2} parent=0 // pred_region
    _
  $region25: #{graphsage_forward.2} parent=0 // pred_fallthru
    _
  %p26 = scmp.eq.s32.totalorder 0, 0
  // Predicated region
  $region26: #{graphsage_forward.2} parent=0 // pred_check
    %p27 = pneg %p26
  $region27: #{graphsage_forward.2} parent=0 // pred_check_branch
    %29 = sbr.rel (%p27) target = $region29
  $region28: #{graphsage_forward.2} parent=0 // pred_region
    %30 = vst [vmem:[#allocation2] sm:$0xff] 0.0
    %31 = vst [vmem:[#allocation2 + $0x8] sm:$0xff] 0.0
    %32 = vst [vmem:[#allocation2 + $0x10] sm:$0xff] 0.0
    %33 = vst [vmem:[#allocation2 + $0x18] sm:$0xff] 0.0
    %34 = vst [vmem:[#allocation2 + $0x20] sm:$0xff] 0.0
    %35 = vst [vmem:[#allocation2 + $0x28] sm:$0xff] 0.0
    %36 = vst [vmem:[#allocation2 + $0x30] sm:$0xff] 0.0
    %37 = vst [vmem:[#allocation2 + $0x38] sm:$0xff] 0.0
    %38 = vst [vmem:[#allocation2 + $0x40] sm:$0xff] 0.0
    %39 = vst [vmem:[#allocation2 + $0x48] sm:$0xff] 0.0
    %40 = vst [vmem:[#allocation2 + $0x50] sm:$0xff] 0.0
    %41 = vst [vmem:[#allocation2 + $0x58] sm:$0xff] 0.0
    %42 = vst [vmem:[#allocation2 + $0x60] sm:$0xff] 0.0
    %43 = vst [vmem:[#allocation2 + $0x68] sm:$0xff] 0.0
    %44 = vst [vmem:[#allocation2 + $0x70] sm:$0xff] 0.0
    %45 = vst [vmem:[#allocation2 + $0x78] sm:$0xff] 0.0
    %46 = vst [vmem:[#allocation2 + $0x80] sm:$0xff] 0.0
    %47 = vst [vmem:[#allocation2 + $0x88] sm:$0xff] 0.0
    %48 = vst [vmem:[#allocation2 + $0x90] sm:$0xff] 0.0
    %49 = vst [vmem:[#allocation2 + $0x98] sm:$0xff] 0.0
    %50 = vst [vmem:[#allocation2 + $0xa0] sm:$0xff] 0.0
    %51 = vst [vmem:[#allocation2 + $0xa8] sm:$0xff] 0.0
    %52 = vst [vmem:[#allocation2 + $0xb0] sm:$0xff] 0.0
    %53 = vst [vmem:[#allocation2 + $0xb8] sm:$0xff] 0.0
    %54 = vst [vmem:[#allocation2 + $0xc0] sm:$0xff] 0.0
    %55 = vst [vmem:[#allocation2 + $0xc8] sm:$0xff] 0.0
    %56 = vst [vmem:[#allocation2 + $0xd0] sm:$0xff] 0.0
    %57 = vst [vmem:[#allocation2 + $0xd8] sm:$0xff] 0.0
    %58 = vst [vmem:[#allocation2 + $0xe0] sm:$0xff] 0.0
    %59 = vst [vmem:[#allocation2 + $0xe8] sm:$0xff] 0.0
    %60 = vst [vmem:[#allocation2 + $0xf0] sm:$0xff] 0.0
    %61 = vst [vmem:[#allocation2 + $0xf8] sm:$0xff] 0.0
  $region29: #{graphsage_forward.2} parent=0 // pred_fallthru
    _
  %v62 = vld [vmem:[#allocation2] sm:$0xff]
  %v63 = vld [vmem:[#allocation2 + $0x8] sm:$0xff]
  %v64 = vld [vmem:[#allocation2 + $0x10] sm:$0xff]
  %v65 = vld [vmem:[#allocation2 + $0x18] sm:$0xff]
  %v66 = vld [vmem:[#allocation2 + $0x20] sm:$0xff]
  %v67 = vld [vmem:[#allocation2 + $0x28] sm:$0xff]
  %v68 = vld [vmem:[#allocation2 + $0x30] sm:$0xff]
  %v69 = vld [vmem:[#allocation2 + $0x38] sm:$0xff]
  %v70 = vld [vmem:[#allocation2 + $0x40] sm:$0xff]
  %v71 = vld [vmem:[#allocation2 + $0x48] sm:$0xff]
  %v72 = vld [vmem:[#allocation2 + $0x50] sm:$0xff]
  %v73 = vld [vmem:[#allocation2 + $0x58] sm:$0xff]
  %v74 = vld [vmem:[#allocation2 + $0x60] sm:$0xff]
  %v75 = vld [vmem:[#allocation2 + $0x68] sm:$0xff]
  %v76 = vld [vmem:[#allocation2 + $0x70] sm:$0xff]
  %v77 = vld [vmem:[#allocation2 + $0x78] sm:$0xff]
  %v78 = vld [vmem:[#allocation2 + $0x80] sm:$0xff]
  %v79 = vld [vmem:[#allocation2 + $0x88] sm:$0xff]
  %v80 = vld [vmem:[#allocation2 + $0x90] sm:$0xff]
  %v81 = vld [vmem:[#allocation2 + $0x98] sm:$0xff]
  %v82 = vld [vmem:[#allocation2 + $0xa0] sm:$0xff]
  %v83 = vld [vmem:[#allocation2 + $0xa8] sm:$0xff]
  %v84 = vld [vmem:[#allocation2 + $0xb0] sm:$0xff]
  %v85 = vld [vmem:[#allocation2 + $0xb8] sm:$0xff]
  %v86 = vld [vmem:[#allocation2 + $0xc0] sm:$0xff]
  %v87 = vld [vmem:[#allocation2 + $0xc8] sm:$0xff]
  %v88 = vld [vmem:[#allocation2 + $0xd0] sm:$0xff]
  %v89 = vld [vmem:[#allocation2 + $0xd8] sm:$0xff]
  %v90 = vld [vmem:[#allocation2 + $0xe0] sm:$0xff]
  %v91 = vld [vmem:[#allocation2 + $0xe8] sm:$0xff]
  %v92 = vld [vmem:[#allocation2 + $0xf0] sm:$0xff]
  %v93 = vld [vmem:[#allocation2 + $0xf8] sm:$0xff]
  %v94 = vld [vmem:[%s0] sm:$0xff]
  %v95 = vld [vmem:[%s0 + $0x8] sm:$0xff]
  %v96 = vld [vmem:[%s0 + $0x10] sm:$0xff]
  %v97 = vld [vmem:[%s0 + $0x18] sm:$0xff]
  %v98 = vld [vmem:[%s0 + $0x20] sm:$0xff]
  %v99 = vld [vmem:[%s0 + $0x28] sm:$0xff]
  %v100 = vld [vmem:[%s0 + $0x30] sm:$0xff]
  %v101 = vld [vmem:[%s0 + $0x38] sm:$0xff]
  %v102 = vld [vmem:[%s0 + $0x40] sm:$0xff]
  %v103 = vld [vmem:[%s0 + $0x48] sm:$0xff]
  %v104 = vld [vmem:[%s0 + $0x50] sm:$0xff]
  %v105 = vld [vmem:[%s0 + $0x58] sm:$0xff]
  %v106 = vld [vmem:[%s0 + $0x60] sm:$0xff]
  %v107 = vld [vmem:[%s0 + $0x68] sm:$0xff]
  %v108 = vld [vmem:[%s0 + $0x70] sm:$0xff]
  %v109 = vld [vmem:[%s0 + $0x78] sm:$0xff]
  %v110 = vunpack.c.l.s8.bf16 %v94
  %v111 = vunpack.c.l.s8.bf16 %v95
  %v112 = vunpack.c.h.s8.bf16 %v94
  %v113 = vunpack.c.h.s8.bf16 %v95
  %v114 = vunpack.c.l.s8.bf16 %v96
  %v115 = vunpack.c.l.s8.bf16 %v97
  %v116 = vunpack.c.h.s8.bf16 %v96
  %v117 = vunpack.c.h.s8.bf16 %v97
  %v118 = vunpack.c.l.s8.bf16 %v98
  %v119 = vunpack.c.l.s8.bf16 %v99
  %v120 = vunpack.c.h.s8.bf16 %v98
  %v121 = vunpack.c.h.s8.bf16 %v99
  %v122 = vunpack.c.l.s8.bf16 %v100
  %v123 = vunpack.c.l.s8.bf16 %v101
  %v124 = vunpack.c.h.s8.bf16 %v100
  %v125 = vunpack.c.h.s8.bf16 %v101
  %v126 = vunpack.c.l.s8.bf16 %v102
  %v127 = vunpack.c.l.s8.bf16 %v103
  %v128 = vunpack.c.h.s8.bf16 %v102
  %v129 = vunpack.c.h.s8.bf16 %v103
  %v130 = vunpack.c.l.s8.bf16 %v104
  %v131 = vunpack.c.l.s8.bf16 %v105
  %v132 = vunpack.c.h.s8.bf16 %v104
  %v133 = vunpack.c.h.s8.bf16 %v105
  %v134 = vunpack.c.l.s8.bf16 %v106
  %v135 = vunpack.c.l.s8.bf16 %v107
  %v136 = vunpack.c.h.s8.bf16 %v106
  %v137 = vunpack.c.h.s8.bf16 %v107
  %v138 = vunpack.c.l.s8.bf16 %v108
  %v139 = vunpack.c.l.s8.bf16 %v109
  %v140 = vunpack.c.h.s8.bf16 %v108
  %v141 = vunpack.c.h.s8.bf16 %v109
  %v142 = vld [vmem:[%s1] sm:$0xf]
  %v143 = vld [vmem:[%s1 + $0x4] sm:$0xf]
  %v144 = vld [vmem:[%s1 + $0x8] sm:$0xf]
  %v145 = vld [vmem:[%s1 + $0xc] sm:$0xf]
  %v146 = vld [vmem:[%s1 + $0x10] sm:$0xf]
  %v147 = vld [vmem:[%s1 + $0x14] sm:$0xf]
  %v148 = vld [vmem:[%s1 + $0x18] sm:$0xf]
  %v149 = vld [vmem:[%s1 + $0x1c] sm:$0xf]
  %v150 = vld [vmem:[%s1 + $0x20] sm:$0xf]
  %v151 = vld [vmem:[%s1 + $0x24] sm:$0xf]
  %v152 = vld [vmem:[%s1 + $0x28] sm:$0xf]
  %v153 = vld [vmem:[%s1 + $0x2c] sm:$0xf]
  %v154 = vld [vmem:[%s1 + $0x30] sm:$0xf]
  %v155 = vld [vmem:[%s1 + $0x34] sm:$0xf]
  %v156 = vld [vmem:[%s1 + $0x38] sm:$0xf]
  %v157 = vld [vmem:[%s1 + $0x3c] sm:$0xf]
  %v158 = vld [vmem:[%s1 + $0x40] sm:$0xf]
  %v159 = vld [vmem:[%s1 + $0x44] sm:$0xf]
  %v160 = vld [vmem:[%s1 + $0x48] sm:$0xf]
  %v161 = vld [vmem:[%s1 + $0x4c] sm:$0xf]
  %v162 = vld [vmem:[%s1 + $0x50] sm:$0xf]
  %v163 = vld [vmem:[%s1 + $0x54] sm:$0xf]
  %v164 = vld [vmem:[%s1 + $0x58] sm:$0xf]
  %v165 = vld [vmem:[%s1 + $0x5c] sm:$0xf]
  %v166 = vld [vmem:[%s1 + $0x60] sm:$0xf]
  %v167 = vld [vmem:[%s1 + $0x64] sm:$0xf]
  %v168 = vld [vmem:[%s1 + $0x68] sm:$0xf]
  %v169 = vld [vmem:[%s1 + $0x6c] sm:$0xf]
  %v170 = vld [vmem:[%s1 + $0x70] sm:$0xf]
  %v171 = vld [vmem:[%s1 + $0x74] sm:$0xf]
  %v172 = vld [vmem:[%s1 + $0x78] sm:$0xf]
  %v173 = vld [vmem:[%s1 + $0x7c] sm:$0xf]
  %v206 = vunpack.c.l.b16 %v142
  %v207 = vunpack.c.l.b16 %v143
  %v208 = vunpack.c.l.b16 %v144
  %v209 = vunpack.c.l.b16 %v145
  %v210 = vunpack.c.l.b16 %v146
  %v211 = vunpack.c.l.b16 %v147
  %v212 = vunpack.c.l.b16 %v148
  %v213 = vunpack.c.l.b16 %v149
  %v214 = vunpack.c.l.b16 %v150
  %v215 = vunpack.c.l.b16 %v151
  %v216 = vunpack.c.l.b16 %v152
  %v217 = vunpack.c.l.b16 %v153
  %v218 = vunpack.c.l.b16 %v154
  %v219 = vunpack.c.l.b16 %v155
  %v220 = vunpack.c.l.b16 %v156
  %v221 = vunpack.c.l.b16 %v157
  %v222 = vunpack.c.l.b16 %v158
  %v223 = vunpack.c.l.b16 %v159
  %v224 = vunpack.c.l.b16 %v160
  %v225 = vunpack.c.l.b16 %v161
  %v226 = vunpack.c.l.b16 %v162
  %v227 = vunpack.c.l.b16 %v163
  %v228 = vunpack.c.l.b16 %v164
  %v229 = vunpack.c.l.b16 %v165
  %v230 = vunpack.c.l.b16 %v166
  %v231 = vunpack.c.l.b16 %v167
  %v232 = vunpack.c.l.b16 %v168
  %v233 = vunpack.c.l.b16 %v169
  %v234 = vunpack.c.l.b16 %v170
  %v235 = vunpack.c.l.b16 %v171
  %v236 = vunpack.c.l.b16 %v172
  %v237 = vunpack.c.l.b16 %v173
  %v238 = vpack.c.b16 %v207, %v206
  %v239 = vpack.c.b16 %v209, %v208
  %v240 = vpack.c.b16 %v211, %v210
  %v241 = vpack.c.b16 %v213, %v212
  %v242 = vpack.c.b16 %v215, %v214
  %v243 = vpack.c.b16 %v217, %v216
  %v244 = vpack.c.b16 %v219, %v218
  %v245 = vpack.c.b16 %v221, %v220
  %v246 = vpack.c.b16 %v223, %v222
  %v247 = vpack.c.b16 %v225, %v224
  %v248 = vpack.c.b16 %v227, %v226
  %v249 = vpack.c.b16 %v229, %v228
  %v250 = vpack.c.b16 %v231, %v230
  %v251 = vpack.c.b16 %v233, %v232
  %v252 = vpack.c.b16 %v235, %v234
  %v253 = vpack.c.b16 %v237, %v236
  %270 = vmatprep.subr.bf16.mxu0 0
  %271 = vmatpush1.bf16.msra.mxu0 %v238
  %272 = vmatprep.subr.bf16.mxu0 0
  %273 = vmatpush1.bf16.msra.mxu0 %v239
  %274 = vmatprep.subr.bf16.mxu0 0
  %275 = vmatpush1.bf16.msra.mxu0 %v240
  %276 = vmatprep.subr.bf16.mxu0 0
  %277 = vmatpush1.bf16.msra.mxu0 %v241
  %278 = vmatprep.subr.bf16.mxu0 0
  %279 = vmatpush1.bf16.msra.mxu0 %v242
  %280 = vmatprep.subr.bf16.mxu0 0
  %281 = vmatpush1.bf16.msra.mxu0 %v243
  %282 = vmatprep.subr.bf16.mxu0 0
  %283 = vmatpush1.bf16.msra.mxu0 %v244
  %284 = vmatprep.subr.bf16.mxu0 0
  %285 = vmatpush1.bf16.msra.mxu0 %v245
  %286 = vmatprep.subr.bf16.mxu0 0
  %287 = vmatpush1.bf16.msra.mxu0 %v246
  %288 = vmatprep.subr.bf16.mxu0 0
  %289 = vmatpush1.bf16.msra.mxu0 %v247
  %290 = vmatprep.subr.bf16.mxu0 0
  %291 = vmatpush1.bf16.msra.mxu0 %v248
  %292 = vmatprep.subr.bf16.mxu0 0
  %293 = vmatpush1.bf16.msra.mxu0 %v249
  %294 = vmatprep.subr.bf16.mxu0 0
  %295 = vmatpush1.bf16.msra.mxu0 %v250
  %296 = vmatprep.subr.bf16.mxu0 0
  %297 = vmatpush1.bf16.msra.mxu0 %v251
  %298 = vmatprep.subr.bf16.mxu0 0
  %299 = vmatpush1.bf16.msra.mxu0 %v252
  %300 = vmatprep.subr.bf16.mxu0 0
  %301 = vmatpush1.bf16.msra.mxu0 %v253
  %302 = vmatprep.mubr.bf16.mxu0 %v111
  %303 = vmatmul.mubr.bf16.gmra.mrb[0].mxu0 %v110
  %v304 = vpop.f32.mrb[0].mxu0
  %v305 = vadd.f32 0.0, %v304
  %v306 = vpop.f32.mrb[0].mxu0
  %v307 = vpop.f32.mrb[0].mxu0
  %v308 = vadd.f32 0.0, %v307
  %v309 = vpop.f32.mrb[0].mxu0
  %310 = vmatprep.mubr.bf16.mxu0 %v113
  %311 = vmatmul.mubr.bf16.gmra.mrb[0].mxu0 %v112
  %v312 = vpop.f32.mrb[0].mxu0
  %v313 = vadd.f32 0.0, %v312
  %v314 = vpop.f32.mrb[0].mxu0
  %v315 = vpop.f32.mrb[0].mxu0
  %v316 = vadd.f32 0.0, %v315
  %v317 = vpop.f32.mrb[0].mxu0
  %318 = vmatprep.mubr.bf16.mxu0 %v115
  %319 = vmatmul.mubr.bf16.gmra.mrb[0].mxu0 %v114
  %v320 = vpop.f32.mrb[0].mxu0
  %v321 = vadd.f32 0.0, %v320
  %v322 = vpop.f32.mrb[0].mxu0
  %v323 = vpop.f32.mrb[0].mxu0
  %v324 = vadd.f32 0.0, %v323
  %v325 = vpop.f32.mrb[0].mxu0
  %326 = vmatprep.mubr.bf16.mxu0 %v117
  %327 = vmatmul.mubr.bf16.gmra.mrb[0].mxu0 %v116
  %v328 = vpop.f32.mrb[0].mxu0
  %v329 = vadd.f32 0.0, %v328
  %v330 = vpop.f32.mrb[0].mxu0
  %v331 = vpop.f32.mrb[0].mxu0
  %v332 = vadd.f32 0.0, %v331
  %v333 = vpop.f32.mrb[0].mxu0
  %334 = vmatprep.mubr.bf16.mxu0 %v119
  %335 = vmatmul.mubr.bf16.gmra.mrb[0].mxu0 %v118
  %v336 = vpop.f32.mrb[0].mxu0
  %v337 = vadd.f32 0.0, %v336
  %v338 = vpop.f32.mrb[0].mxu0
  %v339 = vpop.f32.mrb[0].mxu0
  %v340 = vadd.f32 0.0, %v339
  %v341 = vpop.f32.mrb[0].mxu0
  %342 = vmatprep.mubr.bf16.mxu0 %v121
  %343 = vmatmul.mubr.bf16.gmra.mrb[0].mxu0 %v120
  %v344 = vpop.f32.mrb[0].mxu0
  %v345 = vadd.f32 0.0, %v344
  %v346 = vpop.f32.mrb[0].mxu0
  %v347 = vpop.f32.mrb[0].mxu0
  %v348 = vadd.f32 0.0, %v347
  %v349 = vpop.f32.mrb[0].mxu0
  %350 = vmatprep.mubr.bf16.mxu0 %v123
  %351 = vmatmul.mubr.bf16.gmra.mrb[0].mxu0 %v122
  %v352 = vpop.f32.mrb[0].mxu0
  %v353 = vadd.f32 0.0, %v352
  %v354 = vpop.f32.mrb[0].mxu0
  %v355 = vpop.f32.mrb[0].mxu0
  %v356 = vadd.f32 0.0, %v355
  %v357 = vpop.f32.mrb[0].mxu0
  %358 = vmatprep.mubr.bf16.mxu0 %v125
  %359 = vmatmul.mubr.bf16.gmra.mrb[0].mxu0 %v124
  %v360 = vpop.f32.mrb[0].mxu0
  %v361 = vadd.f32 0.0, %v360
  %v362 = vpop.f32.mrb[0].mxu0
  %v363 = vpop.f32.mrb[0].mxu0
  %v364 = vadd.f32 0.0, %v363
  %v365 = vpop.f32.mrb[0].mxu0
  %366 = vmatprep.mubr.bf16.mxu0 %v127
  %367 = vmatmul.mubr.bf16.gmra.mrb[0].mxu0 %v126
  %v368 = vpop.f32.mrb[0].mxu0
  %v369 = vadd.f32 0.0, %v368
  %v370 = vpop.f32.mrb[0].mxu0
  %v371 = vpop.f32.mrb[0].mxu0
  %v372 = vadd.f32 0.0, %v371
  %v373 = vpop.f32.mrb[0].mxu0
  %374 = vmatprep.mubr.bf16.mxu0 %v129
  %375 = vmatmul.mubr.bf16.gmra.mrb[0].mxu0 %v128
  %v376 = vpop.f32.mrb[0].mxu0
  %v377 = vadd.f32 0.0, %v376
  %v378 = vpop.f32.mrb[0].mxu0
  %v379 = vpop.f32.mrb[0].mxu0
  %v380 = vadd.f32 0.0, %v379
  %v381 = vpop.f32.mrb[0].mxu0
  %382 = vmatprep.mubr.bf16.mxu0 %v131
  %383 = vmatmul.mubr.bf16.gmra.mrb[0].mxu0 %v130
  %v384 = vpop.f32.mrb[0].mxu0
  %v385 = vadd.f32 0.0, %v384
  %v386 = vpop.f32.mrb[0].mxu0
  %v387 = vpop.f32.mrb[0].mxu0
  %v388 = vadd.f32 0.0, %v387
  %v389 = vpop.f32.mrb[0].mxu0
  %390 = vmatprep.mubr.bf16.mxu0 %v133
  %391 = vmatmul.mubr.bf16.gmra.mrb[0].mxu0 %v132
  %v392 = vpop.f32.mrb[0].mxu0
  %v393 = vadd.f32 0.0, %v392
  %v394 = vpop.f32.mrb[0].mxu0
  %v395 = vpop.f32.mrb[0].mxu0
  %v396 = vadd.f32 0.0, %v395
  %v397 = vpop.f32.mrb[0].mxu0
  %398 = vmatprep.mubr.bf16.mxu0 %v135
  %399 = vmatmul.mubr.bf16.gmra.mrb[0].mxu0 %v134
  %v400 = vpop.f32.mrb[0].mxu0
  %v401 = vadd.f32 0.0, %v400
  %v402 = vpop.f32.mrb[0].mxu0
  %v403 = vpop.f32.mrb[0].mxu0
  %v404 = vadd.f32 0.0, %v403
  %v405 = vpop.f32.mrb[0].mxu0
  %406 = vmatprep.mubr.bf16.mxu0 %v137
  %407 = vmatmul.mubr.bf16.gmra.mrb[0].mxu0 %v136
  %v408 = vpop.f32.mrb[0].mxu0
  %v409 = vadd.f32 0.0, %v408
  %v410 = vpop.f32.mrb[0].mxu0
  %v411 = vpop.f32.mrb[0].mxu0
  %v412 = vadd.f32 0.0, %v411
  %v413 = vpop.f32.mrb[0].mxu0
  %414 = vmatprep.mubr.bf16.mxu0 %v139
  %415 = vmatmul.mubr.bf16.gmra.mrb[0].mxu0 %v138
  %v416 = vpop.f32.mrb[0].mxu0
  %v417 = vadd.f32 0.0, %v416
  %v418 = vpop.f32.mrb[0].mxu0
  %v419 = vpop.f32.mrb[0].mxu0
  %v420 = vadd.f32 0.0, %v419
  %v421 = vpop.f32.mrb[0].mxu0
  %422 = vmatprep.mubr.bf16.mxu0 %v141
  %423 = vmatmul.mubr.bf16.gmra.mrb[0].mxu0 %v140
  %v424 = vpop.f32.mrb[0].mxu0
  %v425 = vadd.f32 0.0, %v424
  %v426 = vpop.f32.mrb[0].mxu0
  %v427 = vpop.f32.mrb[0].mxu0
  %v428 = vadd.f32 0.0, %v427
  %v429 = vpop.f32.mrb[0].mxu0
  %430 = vdwg.mxu0
  %v431 = vadd.f32 %v62, %v305
  %v432 = vadd.f32 %v63, %v308
  %v433 = vadd.f32 %v64, %v313
  %v434 = vadd.f32 %v65, %v316
  %v435 = vadd.f32 %v66, %v321
  %v436 = vadd.f32 %v67, %v324
  %v437 = vadd.f32 %v68, %v329
  %v438 = vadd.f32 %v69, %v332
  %v439 = vadd.f32 %v70, %v337
  %v440 = vadd.f32 %v71, %v340
  %v441 = vadd.f32 %v72, %v345
  %v442 = vadd.f32 %v73, %v348
  %v443 = vadd.f32 %v74, %v353
  %v444 = vadd.f32 %v75, %v356
  %v445 = vadd.f32 %v76, %v361
  %v446 = vadd.f32 %v77, %v364
  %v447 = vadd.f32 %v78, %v369
  %v448 = vadd.f32 %v79, %v372
  %v449 = vadd.f32 %v80, %v377
  %v450 = vadd.f32 %v81, %v380
  %v451 = vadd.f32 %v82, %v385
  %v452 = vadd.f32 %v83, %v388
  %v453 = vadd.f32 %v84, %v393
  %v454 = vadd.f32 %v85, %v396
  %v455 = vadd.f32 %v86, %v401
  %v456 = vadd.f32 %v87, %v404
  %v457 = vadd.f32 %v88, %v409
  %v458 = vadd.f32 %v89, %v412
  %v459 = vadd.f32 %v90, %v417
  %v460 = vadd.f32 %v91, %v420
  %v461 = vadd.f32 %v92, %v425
  %v462 = vadd.f32 %v93, %v428
  %463 = vst [vmem:[#allocation2] sm:$0xff] %v431
  %464 = vst [vmem:[#allocation2 + $0x8] sm:$0xff] %v432
  %465 = vst [vmem:[#allocation2 + $0x10] sm:$0xff] %v433
  %466 = vst [vmem:[#allocation2 + $0x18] sm:$0xff] %v434
  %467 = vst [vmem:[#allocation2 + $0x20] sm:$0xff] %v435
  %468 = vst [vmem:[#allocation2 + $0x28] sm:$0xff] %v436
  %469 = vst [vmem:[#allocation2 + $0x30] sm:$0xff] %v437
  %470 = vst [vmem:[#allocation2 + $0x38] sm:$0xff] %v438
  %471 = vst [vmem:[#allocation2 + $0x40] sm:$0xff] %v439
  %472 = vst [vmem:[#allocation2 + $0x48] sm:$0xff] %v440
  %473 = vst [vmem:[#allocation2 + $0x50] sm:$0xff] %v441
  %474 = vst [vmem:[#allocation2 + $0x58] sm:$0xff] %v442
  %475 = vst [vmem:[#allocation2 + $0x60] sm:$0xff] %v443
  %476 = vst [vmem:[#allocation2 + $0x68] sm:$0xff] %v444
  %477 = vst [vmem:[#allocation2 + $0x70] sm:$0xff] %v445
  %478 = vst [vmem:[#allocation2 + $0x78] sm:$0xff] %v446
  %479 = vst [vmem:[#allocation2 + $0x80] sm:$0xff] %v447
  %480 = vst [vmem:[#allocation2 + $0x88] sm:$0xff] %v448
  %481 = vst [vmem:[#allocation2 + $0x90] sm:$0xff] %v449
  %482 = vst [vmem:[#allocation2 + $0x98] sm:$0xff] %v450
  %483 = vst [vmem:[#allocation2 + $0xa0] sm:$0xff] %v451
  %484 = vst [vmem:[#allocation2 + $0xa8] sm:$0xff] %v452
  %485 = vst [vmem:[#allocation2 + $0xb0] sm:$0xff] %v453
  %486 = vst [vmem:[#allocation2 + $0xb8] sm:$0xff] %v454
  %487 = vst [vmem:[#allocation2 + $0xc0] sm:$0xff] %v455
  %488 = vst [vmem:[#allocation2 + $0xc8] sm:$0xff] %v456
  %489 = vst [vmem:[#allocation2 + $0xd0] sm:$0xff] %v457
  %490 = vst [vmem:[#allocation2 + $0xd8] sm:$0xff] %v458
  %491 = vst [vmem:[#allocation2 + $0xe0] sm:$0xff] %v459
  %492 = vst [vmem:[#allocation2 + $0xe8] sm:$0xff] %v460
  %493 = vst [vmem:[#allocation2 + $0xf0] sm:$0xff] %v461
  %494 = vst [vmem:[#allocation2 + $0xf8] sm:$0xff] %v462
  // Predicated region
  $region30: #{graphsage_forward.2} parent=0 // pred_check
    %p495 = pneg %p26
  $region31: #{graphsage_forward.2} parent=0 // pred_check_branch
    %497 = sbr.rel (%p495) target = $region33
  $region32: #{graphsage_forward.2} parent=0 // pred_region
    %v498 = vld [vmem:[#allocation2] sm:$0xff]
    %v499 = vld [vmem:[#allocation2 + $0x8] sm:$0xff]
    %v500 = vld [vmem:[#allocation2 + $0x10] sm:$0xff]
    %v501 = vld [vmem:[#allocation2 + $0x18] sm:$0xff]
    %v502 = vld [vmem:[#allocation2 + $0x20] sm:$0xff]
    %v503 = vld [vmem:[#allocation2 + $0x28] sm:$0xff]
    %v504 = vld [vmem:[#allocation2 + $0x30] sm:$0xff]
    %v505 = vld [vmem:[#allocation2 + $0x38] sm:$0xff]
    %v506 = vld [vmem:[#allocation2 + $0x40] sm:$0xff]
    %v507 = vld [vmem:[#allocation2 + $0x48] sm:$0xff]
    %v508 = vld [vmem:[#allocation2 + $0x50] sm:$0xff]
    %v509 = vld [vmem:[#allocation2 + $0x58] sm:$0xff]
    %v510 = vld [vmem:[#allocation2 + $0x60] sm:$0xff]
    %v511 = vld [vmem:[#allocation2 + $0x68] sm:$0xff]
    %v512 = vld [vmem:[#allocation2 + $0x70] sm:$0xff]
    %v513 = vld [vmem:[#allocation2 + $0x78] sm:$0xff]
    %v514 = vld [vmem:[#allocation2 + $0x80] sm:$0xff]
    %v515 = vld [vmem:[#allocation2 + $0x88] sm:$0xff]
    %v516 = vld [vmem:[#allocation2 + $0x90] sm:$0xff]
    %v517 = vld [vmem:[#allocation2 + $0x98] sm:$0xff]
    %v518 = vld [vmem:[#allocation2 + $0xa0] sm:$0xff]
    %v519 = vld [vmem:[#allocation2 + $0xa8] sm:$0xff]
    %v520 = vld [vmem:[#allocation2 + $0xb0] sm:$0xff]
    %v521 = vld [vmem:[#allocation2 + $0xb8] sm:$0xff]
    %v522 = vld [vmem:[#allocation2 + $0xc0] sm:$0xff]
    %v523 = vld [vmem:[#allocation2 + $0xc8] sm:$0xff]
    %v524 = vld [vmem:[#allocation2 + $0xd0] sm:$0xff]
    %v525 = vld [vmem:[#allocation2 + $0xd8] sm:$0xff]
    %v526 = vld [vmem:[#allocation2 + $0xe0] sm:$0xff]
    %v527 = vld [vmem:[#allocation2 + $0xe8] sm:$0xff]
    %v528 = vld [vmem:[#allocation2 + $0xf0] sm:$0xff]
    %v529 = vld [vmem:[#allocation2 + $0xf8] sm:$0xff]
    %v530 = vpack.c.bf16 %v499, %v498
    %v531 = vpack.c.bf16 %v501, %v500
    %v532 = vpack.c.bf16 %v503, %v502
    %v533 = vpack.c.bf16 %v505, %v504
    %v534 = vpack.c.bf16 %v507, %v506
    %v535 = vpack.c.bf16 %v509, %v508
    %v536 = vpack.c.bf16 %v511, %v510
    %v537 = vpack.c.bf16 %v513, %v512
    %v538 = vpack.c.bf16 %v515, %v514
    %v539 = vpack.c.bf16 %v517, %v516
    %v540 = vpack.c.bf16 %v519, %v518
    %v541 = vpack.c.bf16 %v521, %v520
    %v542 = vpack.c.bf16 %v523, %v522
    %v543 = vpack.c.bf16 %v525, %v524
    %v544 = vpack.c.bf16 %v527, %v526
    %v545 = vpack.c.bf16 %v529, %v528
    %v546 = vld [vmem:[%s2] sm:$0xf]
    %v547 = vld [vmem:[%s2 + $0x4] sm:$0xf]
    %v548 = vld [vmem:[%s2 + $0x8] sm:$0xf]
    %v549 = vld [vmem:[%s2 + $0xc] sm:$0xf]
    %v550 = vld [vmem:[%s2 + $0x10] sm:$0xf]
    %v551 = vld [vmem:[%s2 + $0x14] sm:$0xf]
    %v552 = vld [vmem:[%s2 + $0x18] sm:$0xf]
    %v553 = vld [vmem:[%s2 + $0x1c] sm:$0xf]
    %v554 = vld [vmem:[%s2 + $0x20] sm:$0xf]
    %v555 = vld [vmem:[%s2 + $0x24] sm:$0xf]
    %v556 = vld [vmem:[%s2 + $0x28] sm:$0xf]
    %v557 = vld [vmem:[%s2 + $0x2c] sm:$0xf]
    %v558 = vld [vmem:[%s2 + $0x30] sm:$0xf]
    %v559 = vld [vmem:[%s2 + $0x34] sm:$0xf]
    %v560 = vld [vmem:[%s2 + $0x38] sm:$0xf]
    %v561 = vld [vmem:[%s2 + $0x3c] sm:$0xf]
    %v562 = vld [vmem:[%s2 + $0x40] sm:$0xf]
    %v563 = vld [vmem:[%s2 + $0x44] sm:$0xf]
    %v564 = vld [vmem:[%s2 + $0x48] sm:$0xf]
    %v565 = vld [vmem:[%s2 + $0x4c] sm:$0xf]
    %v566 = vld [vmem:[%s2 + $0x50] sm:$0xf]
    %v567 = vld [vmem:[%s2 + $0x54] sm:$0xf]
    %v568 = vld [vmem:[%s2 + $0x58] sm:$0xf]
    %v569 = vld [vmem:[%s2 + $0x5c] sm:$0xf]
    %v570 = vld [vmem:[%s2 + $0x60] sm:$0xf]
    %v571 = vld [vmem:[%s2 + $0x64] sm:$0xf]
    %v572 = vld [vmem:[%s2 + $0x68] sm:$0xf]
    %v573 = vld [vmem:[%s2 + $0x6c] sm:$0xf]
    %v574 = vld [vmem:[%s2 + $0x70] sm:$0xf]
    %v575 = vld [vmem:[%s2 + $0x74] sm:$0xf]
    %v576 = vld [vmem:[%s2 + $0x78] sm:$0xf]
    %v577 = vld [vmem:[%s2 + $0x7c] sm:$0xf]
    %v610 = vunpack.c.l.b16 %v546
    %v611 = vunpack.c.l.b16 %v547
    %v612 = vunpack.c.l.b16 %v548
    %v613 = vunpack.c.l.b16 %v549
    %v614 = vunpack.c.l.b16 %v550
    %v615 = vunpack.c.l.b16 %v551
    %v616 = vunpack.c.l.b16 %v552
    %v617 = vunpack.c.l.b16 %v553
    %v618 = vunpack.c.l.b16 %v554
    %v619 = vunpack.c.l.b16 %v555
    %v620 = vunpack.c.l.b16 %v556
    %v621 = vunpack.c.l.b16 %v557
    %v622 = vunpack.c.l.b16 %v558
    %v623 = vunpack.c.l.b16 %v559
    %v624 = vunpack.c.l.b16 %v560
    %v625 = vunpack.c.l.b16 %v561
    %v626 = vunpack.c.l.b16 %v562
    %v627 = vunpack.c.l.b16 %v563
    %v628 = vunpack.c.l.b16 %v564
    %v629 = vunpack.c.l.b16 %v565
    %v630 = vunpack.c.l.b16 %v566
    %v631 = vunpack.c.l.b16 %v567
    %v632 = vunpack.c.l.b16 %v568
    %v633 = vunpack.c.l.b16 %v569
    %v634 = vunpack.c.l.b16 %v570
    %v635 = vunpack.c.l.b16 %v571
    %v636 = vunpack.c.l.b16 %v572
    %v637 = vunpack.c.l.b16 %v573
    %v638 = vunpack.c.l.b16 %v574
    %v639 = vunpack.c.l.b16 %v575
    %v640 = vunpack.c.l.b16 %v576
    %v641 = vunpack.c.l.b16 %v577
    %v642 = vpack.c.b16 %v611, %v610
    %v643 = vpack.c.b16 %v613, %v612
    %v644 = vpack.c.b16 %v615, %v614
    %v645 = vpack.c.b16 %v617, %v616
    %v646 = vpack.c.b16 %v619, %v618
    %v647 = vpack.c.b16 %v621, %v620
    %v648 = vpack.c.b16 %v623, %v622
    %v649 = vpack.c.b16 %v625, %v624
    %v650 = vpack.c.b16 %v627, %v626
    %v651 = vpack.c.b16 %v629, %v628
    %v652 = vpack.c.b16 %v631, %v630
    %v653 = vpack.c.b16 %v633, %v632
    %v654 = vpack.c.b16 %v635, %v634
    %v655 = vpack.c.b16 %v637, %v636
    %v656 = vpack.c.b16 %v639, %v638
    %v657 = vpack.c.b16 %v641, %v640
    %v674 = vld [vmem:[%s3] sm:$0xf]
    %v675 = vld [vmem:[%s3 + $0x4] sm:$0xf]
    %v676 = vld [vmem:[%s3 + $0x8] sm:$0xf]
    %v677 = vld [vmem:[%s3 + $0xc] sm:$0xf]
    %v678 = vld [vmem:[%s3 + $0x10] sm:$0xf]
    %v679 = vld [vmem:[%s3 + $0x14] sm:$0xf]
    %v680 = vld [vmem:[%s3 + $0x18] sm:$0xf]
    %v681 = vld [vmem:[%s3 + $0x1c] sm:$0xf]
    %v682 = vld [vmem:[%s3 + $0x20] sm:$0xf]
    %v683 = vld [vmem:[%s3 + $0x24] sm:$0xf]
    %v684 = vld [vmem:[%s3 + $0x28] sm:$0xf]
    %v685 = vld [vmem:[%s3 + $0x2c] sm:$0xf]
    %v686 = vld [vmem:[%s3 + $0x30] sm:$0xf]
    %v687 = vld [vmem:[%s3 + $0x34] sm:$0xf]
    %v688 = vld [vmem:[%s3 + $0x38] sm:$0xf]
    %v689 = vld [vmem:[%s3 + $0x3c] sm:$0xf]
    %v690 = vld [vmem:[%s3 + $0x40] sm:$0xf]
    %v691 = vld [vmem:[%s3 + $0x44] sm:$0xf]
    %v692 = vld [vmem:[%s3 + $0x48] sm:$0xf]
    %v693 = vld [vmem:[%s3 + $0x4c] sm:$0xf]
    %v694 = vld [vmem:[%s3 + $0x50] sm:$0xf]
    %v695 = vld [vmem:[%s3 + $0x54] sm:$0xf]
    %v696 = vld [vmem:[%s3 + $0x58] sm:$0xf]
    %v697 = vld [vmem:[%s3 + $0x5c] sm:$0xf]
    %v698 = vld [vmem:[%s3 + $0x60] sm:$0xf]
    %v699 = vld [vmem:[%s3 + $0x64] sm:$0xf]
    %v700 = vld [vmem:[%s3 + $0x68] sm:$0xf]
    %v701 = vld [vmem:[%s3 + $0x6c] sm:$0xf]
    %v702 = vld [vmem:[%s3 + $0x70] sm:$0xf]
    %v703 = vld [vmem:[%s3 + $0x74] sm:$0xf]
    %v704 = vld [vmem:[%s3 + $0x78] sm:$0xf]
    %v705 = vld [vmem:[%s3 + $0x7c] sm:$0xf]
    %v706 = vld [vmem:[%s4] sm:$0x1]
    %v708 = vlaneseq
    %v709 = vshrl.u32 %v708, 7
    %v710 = vsub.s32 0, %v709
    %v711 = vrot.slane %v706, %v710
    %v745 = vunpack.c.l.b16 %v674
    %v746 = vunpack.c.l.b16 %v675
    %v747 = vunpack.c.l.b16 %v676
    %v748 = vunpack.c.l.b16 %v677
    %v749 = vunpack.c.l.b16 %v678
    %v750 = vunpack.c.l.b16 %v679
    %v751 = vunpack.c.l.b16 %v680
    %v752 = vunpack.c.l.b16 %v681
    %v753 = vunpack.c.l.b16 %v682
    %v754 = vunpack.c.l.b16 %v683
    %v755 = vunpack.c.l.b16 %v684
    %v756 = vunpack.c.l.b16 %v685
    %v757 = vunpack.c.l.b16 %v686
    %v758 = vunpack.c.l.b16 %v687
    %v759 = vunpack.c.l.b16 %v688
    %v760 = vunpack.c.l.b16 %v689
    %v761 = vunpack.c.l.b16 %v690
    %v762 = vunpack.c.l.b16 %v691
    %v763 = vunpack.c.l.b16 %v692
    %v764 = vunpack.c.l.b16 %v693
    %v765 = vunpack.c.l.b16 %v694
    %v766 = vunpack.c.l.b16 %v695
    %v767 = vunpack.c.l.b16 %v696
    %v768 = vunpack.c.l.b16 %v697
    %v769 = vunpack.c.l.b16 %v698
    %v770 = vunpack.c.l.b16 %v699
    %v771 = vunpack.c.l.b16 %v700
    %v772 = vunpack.c.l.b16 %v701
    %v773 = vunpack.c.l.b16 %v702
    %v774 = vunpack.c.l.b16 %v703
    %v775 = vunpack.c.l.b16 %v704
    %v776 = vunpack.c.l.b16 %v705
    %v777 = vpack.c.b16 %v746, %v745
    %v778 = vpack.c.b16 %v748, %v747
    %v779 = vpack.c.b16 %v750, %v749
    %v780 = vpack.c.b16 %v752, %v751
    %v781 = vpack.c.b16 %v754, %v753
    %v782 = vpack.c.b16 %v756, %v755
    %v783 = vpack.c.b16 %v758, %v757
    %v784 = vpack.c.b16 %v760, %v759
    %v785 = vpack.c.b16 %v762, %v761
    %v786 = vpack.c.b16 %v764, %v763
    %v787 = vpack.c.b16 %v766, %v765
    %v788 = vpack.c.b16 %v768, %v767
    %v789 = vpack.c.b16 %v770, %v769
    %v790 = vpack.c.b16 %v772, %v771
    %v791 = vpack.c.b16 %v774, %v773
    %v792 = vpack.c.b16 %v776, %v775
    %809 = vmatprep.subr.bf16.mxu0 0
    %810 = vmatpush1.bf16.msra.mxu0 %v777
    %811 = vmatprep.subr.bf16.mxu0 0
    %812 = vmatpush1.bf16.msra.mxu0 %v778
    %813 = vmatprep.subr.bf16.mxu0 0
    %814 = vmatpush1.bf16.msra.mxu0 %v779
    %815 = vmatprep.subr.bf16.mxu0 0
    %816 = vmatpush1.bf16.msra.mxu0 %v780
    %817 = vmatprep.subr.bf16.mxu0 0
    %818 = vmatpush1.bf16.msra.mxu0 %v781
    %819 = vmatprep.subr.bf16.mxu0 0
    %820 = vmatpush1.bf16.msra.mxu0 %v782
    %821 = vmatprep.subr.bf16.mxu0 0
    %822 = vmatpush1.bf16.msra.mxu0 %v783
    %823 = vmatprep.subr.bf16.mxu0 0
    %824 = vmatpush1.bf16.msra.mxu0 %v784
    %825 = vmatprep.subr.bf16.mxu0 0
    %826 = vmatpush1.bf16.msra.mxu0 %v785
    %827 = vmatprep.subr.bf16.mxu0 0
    %828 = vmatpush1.bf16.msra.mxu0 %v786
    %829 = vmatprep.subr.bf16.mxu0 0
    %830 = vmatpush1.bf16.msra.mxu0 %v787
    %831 = vmatprep.subr.bf16.mxu0 0
    %832 = vmatpush1.bf16.msra.mxu0 %v788
    %833 = vmatprep.subr.bf16.mxu0 0
    %834 = vmatpush1.bf16.msra.mxu0 %v789
    %835 = vmatprep.subr.bf16.mxu0 0
    %836 = vmatpush1.bf16.msra.mxu0 %v790
    %837 = vmatprep.subr.bf16.mxu0 0
    %838 = vmatpush1.bf16.msra.mxu0 %v791
    %839 = vmatprep.subr.bf16.mxu0 0
    %840 = vmatpush1.bf16.msra.mxu0 %v792
    %841 = vmatprep.mubr.bf16.mxu0 %v642
    %842 = vmatmul.mubr.bf16.gmra.mrb[0].mxu0 %v530
    %v843 = vpop.f32.mrb[0].mxu0
    %v844 = vadd.f32 %v711, %v843
    %v845 = vpop.f32.mrb[0].mxu0
    %v846 = vpop.f32.mrb[0].mxu0
    %v847 = vadd.f32 %v711, %v846
    %v848 = vpop.f32.mrb[0].mxu0
    %849 = vmatprep.mubr.bf16.mxu0 %v643
    %850 = vmatmul.mubr.bf16.gmra.mrb[0].mxu0 %v531
    %v851 = vpop.f32.mrb[0].mxu0
    %v852 = vadd.f32 %v711, %v851
    %v853 = vpop.f32.mrb[0].mxu0
    %v854 = vpop.f32.mrb[0].mxu0
    %v855 = vadd.f32 %v711, %v854
    %v856 = vpop.f32.mrb[0].mxu0
    %857 = vmatprep.mubr.bf16.mxu0 %v644
    %858 = vmatmul.mubr.bf16.gmra.mrb[0].mxu0 %v532
    %v859 = vpop.f32.mrb[0].mxu0
    %v860 = vadd.f32 %v711, %v859
    %v861 = vpop.f32.mrb[0].mxu0
    %v862 = vpop.f32.mrb[0].mxu0
    %v863 = vadd.f32 %v711, %v862
    %v864 = vpop.f32.mrb[0].mxu0
    %865 = vmatprep.mubr.bf16.mxu0 %v645
    %866 = vmatmul.mubr.bf16.gmra.mrb[0].mxu0 %v533
    %v867 = vpop.f32.mrb[0].mxu0
    %v868 = vadd.f32 %v711, %v867
    %v869 = vpop.f32.mrb[0].mxu0
    %v870 = vpop.f32.mrb[0].mxu0
    %v871 = vadd.f32 %v711, %v870
    %v872 = vpop.f32.mrb[0].mxu0
    %873 = vmatprep.mubr.bf16.mxu0 %v646
    %874 = vmatmul.mubr.bf16.gmra.mrb[0].mxu0 %v534
    %v875 = vpop.f32.mrb[0].mxu0
    %v876 = vadd.f32 %v711, %v875
    %v877 = vpop.f32.mrb[0].mxu0
    %v878 = vpop.f32.mrb[0].mxu0
    %v879 = vadd.f32 %v711, %v878
    %v880 = vpop.f32.mrb[0].mxu0
    %881 = vmatprep.mubr.bf16.mxu0 %v647
    %882 = vmatmul.mubr.bf16.gmra.mrb[0].mxu0 %v535
    %v883 = vpop.f32.mrb[0].mxu0
    %v884 = vadd.f32 %v711, %v883
    %v885 = vpop.f32.mrb[0].mxu0
    %v886 = vpop.f32.mrb[0].mxu0
    %v887 = vadd.f32 %v711, %v886
    %v888 = vpop.f32.mrb[0].mxu0
    %889 = vmatprep.mubr.bf16.mxu0 %v648
    %890 = vmatmul.mubr.bf16.gmra.mrb[0].mxu0 %v536
    %v891 = vpop.f32.mrb[0].mxu0
    %v892 = vadd.f32 %v711, %v891
    %v893 = vpop.f32.mrb[0].mxu0
    %v894 = vpop.f32.mrb[0].mxu0
    %v895 = vadd.f32 %v711, %v894
    %v896 = vpop.f32.mrb[0].mxu0
    %897 = vmatprep.mubr.bf16.mxu0 %v649
    %898 = vmatmul.mubr.bf16.gmra.mrb[0].mxu0 %v537
    %v899 = vpop.f32.mrb[0].mxu0
    %v900 = vadd.f32 %v711, %v899
    %v901 = vpop.f32.mrb[0].mxu0
    %v902 = vpop.f32.mrb[0].mxu0
    %v903 = vadd.f32 %v711, %v902
    %v904 = vpop.f32.mrb[0].mxu0
    %905 = vmatprep.mubr.bf16.mxu0 %v650
    %906 = vmatmul.mubr.bf16.gmra.mrb[0].mxu0 %v538
    %v907 = vpop.f32.mrb[0].mxu0
    %v908 = vadd.f32 %v711, %v907
    %v909 = vpop.f32.mrb[0].mxu0
    %v910 = vpop.f32.mrb[0].mxu0
    %v911 = vadd.f32 %v711, %v910
    %v912 = vpop.f32.mrb[0].mxu0
    %913 = vmatprep.mubr.bf16.mxu0 %v651
    %914 = vmatmul.mubr.bf16.gmra.mrb[0].mxu0 %v539
    %v915 = vpop.f32.mrb[0].mxu0
    %v916 = vadd.f32 %v711, %v915
    %v917 = vpop.f32.mrb[0].mxu0
    %v918 = vpop.f32.mrb[0].mxu0
    %v919 = vadd.f32 %v711, %v918
    %v920 = vpop.f32.mrb[0].mxu0
    %921 = vmatprep.mubr.bf16.mxu0 %v652
    %922 = vmatmul.mubr.bf16.gmra.mrb[0].mxu0 %v540
    %v923 = vpop.f32.mrb[0].mxu0
    %v924 = vadd.f32 %v711, %v923
    %v925 = vpop.f32.mrb[0].mxu0
    %v926 = vpop.f32.mrb[0].mxu0
    %v927 = vadd.f32 %v711, %v926
    %v928 = vpop.f32.mrb[0].mxu0
    %929 = vmatprep.mubr.bf16.mxu0 %v653
    %930 = vmatmul.mubr.bf16.gmra.mrb[0].mxu0 %v541
    %v931 = vpop.f32.mrb[0].mxu0
    %v932 = vadd.f32 %v711, %v931
    %v933 = vpop.f32.mrb[0].mxu0
    %v934 = vpop.f32.mrb[0].mxu0
    %v935 = vadd.f32 %v711, %v934
    %v936 = vpop.f32.mrb[0].mxu0
    %937 = vmatprep.mubr.bf16.mxu0 %v654
    %938 = vmatmul.mubr.bf16.gmra.mrb[0].mxu0 %v542
    %v939 = vpop.f32.mrb[0].mxu0
    %v940 = vadd.f32 %v711, %v939
    %v941 = vpop.f32.mrb[0].mxu0
    %v942 = vpop.f32.mrb[0].mxu0
    %v943 = vadd.f32 %v711, %v942
    %v944 = vpop.f32.mrb[0].mxu0
    %945 = vmatprep.mubr.bf16.mxu0 %v655
    %946 = vmatmul.mubr.bf16.gmra.mrb[0].mxu0 %v543
    %v947 = vpop.f32.mrb[0].mxu0
    %v948 = vadd.f32 %v711, %v947
    %v949 = vpop.f32.mrb[0].mxu0
    %v950 = vpop.f32.mrb[0].mxu0
    %v951 = vadd.f32 %v711, %v950
    %v952 = vpop.f32.mrb[0].mxu0
    %953 = vmatprep.mubr.bf16.mxu0 %v656
    %954 = vmatmul.mubr.bf16.gmra.mrb[0].mxu0 %v544
    %v955 = vpop.f32.mrb[0].mxu0
    %v956 = vadd.f32 %v711, %v955
    %v957 = vpop.f32.mrb[0].mxu0
    %v958 = vpop.f32.mrb[0].mxu0
    %v959 = vadd.f32 %v711, %v958
    %v960 = vpop.f32.mrb[0].mxu0
    %961 = vmatprep.mubr.bf16.mxu0 %v657
    %962 = vmatmul.mubr.bf16.gmra.mrb[0].mxu0 %v545
    %v963 = vpop.f32.mrb[0].mxu0
    %v964 = vadd.f32 %v711, %v963
    %v965 = vpop.f32.mrb[0].mxu0
    %v966 = vpop.f32.mrb[0].mxu0
    %v967 = vadd.f32 %v711, %v966
    %v968 = vpop.f32.mrb[0].mxu0
    %969 = vdwg.mxu0
    %v970 = vmax.f32 %v844, 0.0
    %v971 = vmax.f32 %v847, 0.0
    %v972 = vmax.f32 %v852, 0.0
    %v973 = vmax.f32 %v855, 0.0
    %v974 = vmax.f32 %v860, 0.0
    %v975 = vmax.f32 %v863, 0.0
    %v976 = vmax.f32 %v868, 0.0
    %v977 = vmax.f32 %v871, 0.0
    %v978 = vmax.f32 %v876, 0.0
    %v979 = vmax.f32 %v879, 0.0
    %v980 = vmax.f32 %v884, 0.0
    %v981 = vmax.f32 %v887, 0.0
    %v982 = vmax.f32 %v892, 0.0
    %v983 = vmax.f32 %v895, 0.0
    %v984 = vmax.f32 %v900, 0.0
    %v985 = vmax.f32 %v903, 0.0
    %v986 = vmax.f32 %v908, 0.0
    %v987 = vmax.f32 %v911, 0.0
    %v988 = vmax.f32 %v916, 0.0
    %v989 = vmax.f32 %v919, 0.0
    %v990 = vmax.f32 %v924, 0.0
    %v991 = vmax.f32 %v927, 0.0
    %v992 = vmax.f32 %v932, 0.0
    %v993 = vmax.f32 %v935, 0.0
    %v994 = vmax.f32 %v940, 0.0
    %v995 = vmax.f32 %v943, 0.0
    %v996 = vmax.f32 %v948, 0.0
    %v997 = vmax.f32 %v951, 0.0
    %v998 = vmax.f32 %v956, 0.0
    %v999 = vmax.f32 %v959, 0.0
    %v1000 = vmax.f32 %v964, 0.0
    %v1001 = vmax.f32 %v967, 0.0
    %v1002 = vpack.c.bf16 %v971, %v970
    %v1003 = vpack.c.bf16 %v973, %v972
    %v1004 = vpack.c.bf16 %v975, %v974
    %v1005 = vpack.c.bf16 %v977, %v976
    %v1006 = vpack.c.bf16 %v979, %v978
    %v1007 = vpack.c.bf16 %v981, %v980
    %v1008 = vpack.c.bf16 %v983, %v982
    %v1009 = vpack.c.bf16 %v985, %v984
    %v1010 = vpack.c.bf16 %v987, %v986
    %v1011 = vpack.c.bf16 %v989, %v988
    %v1012 = vpack.c.bf16 %v991, %v990
    %v1013 = vpack.c.bf16 %v993, %v992
    %v1014 = vpack.c.bf16 %v995, %v994
    %v1015 = vpack.c.bf16 %v997, %v996
    %v1016 = vpack.c.bf16 %v999, %v998
    %v1017 = vpack.c.bf16 %v1001, %v1000
    %v1018 = vld [vmem:[%s5] sm:$0xff]
    %v1019 = vld [vmem:[%s5 + $0x8] sm:$0xff]
    %v1020 = vld [vmem:[%s5 + $0x10] sm:$0xff]
    %v1021 = vld [vmem:[%s5 + $0x18] sm:$0xff]
    %v1022 = vld [vmem:[%s5 + $0x20] sm:$0xff]
    %v1023 = vld [vmem:[%s5 + $0x28] sm:$0xff]
    %v1024 = vld [vmem:[%s5 + $0x30] sm:$0xff]
    %v1025 = vld [vmem:[%s5 + $0x38] sm:$0xff]
    %v1026 = vld [vmem:[%s5 + $0x40] sm:$0xff]
    %v1027 = vld [vmem:[%s5 + $0x48] sm:$0xff]
    %v1028 = vld [vmem:[%s5 + $0x50] sm:$0xff]
    %v1029 = vld [vmem:[%s5 + $0x58] sm:$0xff]
    %v1030 = vld [vmem:[%s5 + $0x60] sm:$0xff]
    %v1031 = vld [vmem:[%s5 + $0x68] sm:$0xff]
    %v1032 = vld [vmem:[%s5 + $0x70] sm:$0xff]
    %v1033 = vld [vmem:[%s5 + $0x78] sm:$0xff]
    %v1050 = vunpack.c.l.b16 %v1018
    %v1051 = vunpack.c.h.b16 %v1018
    %v1052 = vunpack.c.l.b16 %v1019
    %v1053 = vunpack.c.h.b16 %v1019
    %v1054 = vunpack.c.l.b16 %v1020
    %v1055 = vunpack.c.h.b16 %v1020
    %v1056 = vunpack.c.l.b16 %v1021
    %v1057 = vunpack.c.h.b16 %v1021
    %v1058 = vunpack.c.l.b16 %v1022
    %v1059 = vunpack.c.h.b16 %v1022
    %v1060 = vunpack.c.l.b16 %v1023
    %v1061 = vunpack.c.h.b16 %v1023
    %v1062 = vunpack.c.l.b16 %v1024
    %v1063 = vunpack.c.h.b16 %v1024
    %v1064 = vunpack.c.l.b16 %v1025
    %v1065 = vunpack.c.h.b16 %v1025
    %v1066 = vunpack.c.l.b16 %v1026
    %v1067 = vunpack.c.h.b16 %v1026
    %v1068 = vunpack.c.l.b16 %v1027
    %v1069 = vunpack.c.h.b16 %v1027
    %v1070 = vunpack.c.l.b16 %v1028
    %v1071 = vunpack.c.h.b16 %v1028
    %v1072 = vunpack.c.l.b16 %v1029
    %v1073 = vunpack.c.h.b16 %v1029
    %v1074 = vunpack.c.l.b16 %v1030
    %v1075 = vunpack.c.h.b16 %v1030
    %v1076 = vunpack.c.l.b16 %v1031
    %v1077 = vunpack.c.h.b16 %v1031
    %v1078 = vunpack.c.l.b16 %v1032
    %v1079 = vunpack.c.h.b16 %v1032
    %v1080 = vunpack.c.l.b16 %v1033
    %v1081 = vunpack.c.h.b16 %v1033
    %v1082 = vpack.c.b16 %v1052, %v1050
    %v1083 = vpack.c.b16 %v1053, %v1051
    %v1084 = vpack.c.b16 %v1056, %v1054
    %v1085 = vpack.c.b16 %v1057, %v1055
    %v1086 = vpack.c.b16 %v1060, %v1058
    %v1087 = vpack.c.b16 %v1061, %v1059
    %v1088 = vpack.c.b16 %v1064, %v1062
    %v1089 = vpack.c.b16 %v1065, %v1063
    %v1090 = vpack.c.b16 %v1068, %v1066
    %v1091 = vpack.c.b16 %v1069, %v1067
    %v1092 = vpack.c.b16 %v1072, %v1070
    %v1093 = vpack.c.b16 %v1073, %v1071
    %v1094 = vpack.c.b16 %v1076, %v1074
    %v1095 = vpack.c.b16 %v1077, %v1075
    %v1096 = vpack.c.b16 %v1080, %v1078
    %v1097 = vpack.c.b16 %v1081, %v1079
    %1114 = vmatprep.subr.bf16.mxu0 %v1083
    %1115 = vmatpush1.bf16.msra.mxu0 %v1082
    %1116 = vmatprep.subr.bf16.mxu0 %v1085
    %1117 = vmatpush1.bf16.msra.mxu0 %v1084
    %1118 = vmatprep.subr.bf16.mxu0 %v1087
    %1119 = vmatpush1.bf16.msra.mxu0 %v1086
    %1120 = vmatprep.subr.bf16.mxu0 %v1089
    %1121 = vmatpush1.bf16.msra.mxu0 %v1088
    %1122 = vmatprep.subr.bf16.mxu0 %v1091
    %1123 = vmatpush1.bf16.msra.mxu0 %v1090
    %1124 = vmatprep.subr.bf16.mxu0 %v1093
    %1125 = vmatpush1.bf16.msra.mxu0 %v1092
    %1126 = vmatprep.subr.bf16.mxu0 %v1095
    %1127 = vmatpush1.bf16.msra.mxu0 %v1094
    %1128 = vmatprep.subr.bf16.mxu0 %v1097
    %1129 = vmatpush1.bf16.msra.mxu0 %v1096
    %1130 = vmatprep.subr.bf16.mxu0 0
    %1131 = vmatpush1.bf16.msra.mxu0 0
    %1132 = vmatprep.subr.bf16.mxu0 0
    %1133 = vmatpush1.bf16.msra.mxu0 0
    %1134 = vmatprep.subr.bf16.mxu0 0
    %1135 = vmatpush1.bf16.msra.mxu0 0
    %1136 = vmatprep.subr.bf16.mxu0 0
    %1137 = vmatpush1.bf16.msra.mxu0 0
    %1138 = vmatprep.subr.bf16.mxu0 0
    %1139 = vmatpush1.bf16.msra.mxu0 0
    %1140 = vmatprep.subr.bf16.mxu0 0
    %1141 = vmatpush1.bf16.msra.mxu0 0
    %1142 = vmatprep.subr.bf16.mxu0 0
    %1143 = vmatpush1.bf16.msra.mxu0 0
    %1144 = vmatprep.subr.bf16.mxu0 0
    %1145 = vmatpush1.bf16.msra.mxu0 0
    %1146 = vmatprep.mubr.bf16.mxu0 0
    %1147 = vmatmul.mubr.bf16.gmra.mrb[0].mxu0 %v1002
    %v1148 = vpop.f32.mrb[0].mxu0
    %v1149 = vadd.f32 0.0, %v1148
    %v1150 = vpop.f32.mrb[0].mxu0
    %v1151 = vadd.f32 0.0, %v1150
    %v1152 = vpop.f32.mrb[0].mxu0
    %v1153 = vadd.f32 0.0, %v1152
    %v1154 = vpop.f32.mrb[0].mxu0
    %v1155 = vadd.f32 0.0, %v1154
    %1156 = vmatprep.mubr.bf16.mxu0 0
    %1157 = vmatmul.mubr.bf16.gmra.mrb[0].mxu0 %v1003
    %v1158 = vpop.f32.mrb[0].mxu0
    %v1159 = vadd.f32 0.0, %v1158
    %v1160 = vpop.f32.mrb[0].mxu0
    %v1161 = vadd.f32 0.0, %v1160
    %v1162 = vpop.f32.mrb[0].mxu0
    %v1163 = vadd.f32 0.0, %v1162
    %v1164 = vpop.f32.mrb[0].mxu0
    %v1165 = vadd.f32 0.0, %v1164
    %1166 = vmatprep.mubr.bf16.mxu0 0
    %1167 = vmatmul.mubr.bf16.gmra.mrb[0].mxu0 %v1004
    %v1168 = vpop.f32.mrb[0].mxu0
    %v1169 = vadd.f32 0.0, %v1168
    %v1170 = vpop.f32.mrb[0].mxu0
    %v1171 = vadd.f32 0.0, %v1170
    %v1172 = vpop.f32.mrb[0].mxu0
    %v1173 = vadd.f32 0.0, %v1172
    %v1174 = vpop.f32.mrb[0].mxu0
    %v1175 = vadd.f32 0.0, %v1174
    %1176 = vmatprep.mubr.bf16.mxu0 0
    %1177 = vmatmul.mubr.bf16.gmra.mrb[0].mxu0 %v1005
    %v1178 = vpop.f32.mrb[0].mxu0
    %v1179 = vadd.f32 0.0, %v1178
    %v1180 = vpop.f32.mrb[0].mxu0
    %v1181 = vadd.f32 0.0, %v1180
    %v1182 = vpop.f32.mrb[0].mxu0
    %v1183 = vadd.f32 0.0, %v1182
    %v1184 = vpop.f32.mrb[0].mxu0
    %v1185 = vadd.f32 0.0, %v1184
    %1186 = vmatprep.mubr.bf16.mxu0 0
    %1187 = vmatmul.mubr.bf16.gmra.mrb[0].mxu0 %v1006
    %v1188 = vpop.f32.mrb[0].mxu0
    %v1189 = vadd.f32 0.0, %v1188
    %v1190 = vpop.f32.mrb[0].mxu0
    %v1191 = vadd.f32 0.0, %v1190
    %v1192 = vpop.f32.mrb[0].mxu0
    %v1193 = vadd.f32 0.0, %v1192
    %v1194 = vpop.f32.mrb[0].mxu0
    %v1195 = vadd.f32 0.0, %v1194
    %1196 = vmatprep.mubr.bf16.mxu0 0
    %1197 = vmatmul.mubr.bf16.gmra.mrb[0].mxu0 %v1007
    %v1198 = vpop.f32.mrb[0].mxu0
    %v1199 = vadd.f32 0.0, %v1198
    %v1200 = vpop.f32.mrb[0].mxu0
    %v1201 = vadd.f32 0.0, %v1200
    %v1202 = vpop.f32.mrb[0].mxu0
    %v1203 = vadd.f32 0.0, %v1202
    %v1204 = vpop.f32.mrb[0].mxu0
    %v1205 = vadd.f32 0.0, %v1204
    %1206 = vmatprep.mubr.bf16.mxu0 0
    %1207 = vmatmul.mubr.bf16.gmra.mrb[0].mxu0 %v1008
    %v1208 = vpop.f32.mrb[0].mxu0
    %v1209 = vadd.f32 0.0, %v1208
    %v1210 = vpop.f32.mrb[0].mxu0
    %v1211 = vadd.f32 0.0, %v1210
    %v1212 = vpop.f32.mrb[0].mxu0
    %v1213 = vadd.f32 0.0, %v1212
    %v1214 = vpop.f32.mrb[0].mxu0
    %v1215 = vadd.f32 0.0, %v1214
    %1216 = vmatprep.mubr.bf16.mxu0 0
    %1217 = vmatmul.mubr.bf16.gmra.mrb[0].mxu0 %v1009
    %v1218 = vpop.f32.mrb[0].mxu0
    %v1219 = vadd.f32 0.0, %v1218
    %v1220 = vpop.f32.mrb[0].mxu0
    %v1221 = vadd.f32 0.0, %v1220
    %v1222 = vpop.f32.mrb[0].mxu0
    %v1223 = vadd.f32 0.0, %v1222
    %v1224 = vpop.f32.mrb[0].mxu0
    %v1225 = vadd.f32 0.0, %v1224
    %1226 = vmatprep.mubr.bf16.mxu0 0
    %1227 = vmatmul.mubr.bf16.gmra.mrb[0].mxu0 %v1010
    %v1228 = vpop.f32.mrb[0].mxu0
    %v1229 = vadd.f32 0.0, %v1228
    %v1230 = vpop.f32.mrb[0].mxu0
    %v1231 = vadd.f32 0.0, %v1230
    %v1232 = vpop.f32.mrb[0].mxu0
    %v1233 = vadd.f32 0.0, %v1232
    %v1234 = vpop.f32.mrb[0].mxu0
    %v1235 = vadd.f32 0.0, %v1234
    %1236 = vmatprep.mubr.bf16.mxu0 0
    %1237 = vmatmul.mubr.bf16.gmra.mrb[0].mxu0 %v1011
    %v1238 = vpop.f32.mrb[0].mxu0
    %v1239 = vadd.f32 0.0, %v1238
    %v1240 = vpop.f32.mrb[0].mxu0
    %v1241 = vadd.f32 0.0, %v1240
    %v1242 = vpop.f32.mrb[0].mxu0
    %v1243 = vadd.f32 0.0, %v1242
    %v1244 = vpop.f32.mrb[0].mxu0
    %v1245 = vadd.f32 0.0, %v1244
    %1246 = vmatprep.mubr.bf16.mxu0 0
    %1247 = vmatmul.mubr.bf16.gmra.mrb[0].mxu0 %v1012
    %v1248 = vpop.f32.mrb[0].mxu0
    %v1249 = vadd.f32 0.0, %v1248
    %v1250 = vpop.f32.mrb[0].mxu0
    %v1251 = vadd.f32 0.0, %v1250
    %v1252 = vpop.f32.mrb[0].mxu0
    %v1253 = vadd.f32 0.0, %v1252
    %v1254 = vpop.f32.mrb[0].mxu0
    %v1255 = vadd.f32 0.0, %v1254
    %1256 = vmatprep.mubr.bf16.mxu0 0
    %1257 = vmatmul.mubr.bf16.gmra.mrb[0].mxu0 %v1013
    %v1258 = vpop.f32.mrb[0].mxu0
    %v1259 = vadd.f32 0.0, %v1258
    %v1260 = vpop.f32.mrb[0].mxu0
    %v1261 = vadd.f32 0.0, %v1260
    %v1262 = vpop.f32.mrb[0].mxu0
    %v1263 = vadd.f32 0.0, %v1262
    %v1264 = vpop.f32.mrb[0].mxu0
    %v1265 = vadd.f32 0.0, %v1264
    %1266 = vmatprep.mubr.bf16.mxu0 0
    %1267 = vmatmul.mubr.bf16.gmra.mrb[0].mxu0 %v1014
    %v1268 = vpop.f32.mrb[0].mxu0
    %v1269 = vadd.f32 0.0, %v1268
    %v1270 = vpop.f32.mrb[0].mxu0
    %v1271 = vadd.f32 0.0, %v1270
    %v1272 = vpop.f32.mrb[0].mxu0
    %v1273 = vadd.f32 0.0, %v1272
    %v1274 = vpop.f32.mrb[0].mxu0
    %v1275 = vadd.f32 0.0, %v1274
    %1276 = vmatprep.mubr.bf16.mxu0 0
    %1277 = vmatmul.mubr.bf16.gmra.mrb[0].mxu0 %v1015
    %v1278 = vpop.f32.mrb[0].mxu0
    %v1279 = vadd.f32 0.0, %v1278
    %v1280 = vpop.f32.mrb[0].mxu0
    %v1281 = vadd.f32 0.0, %v1280
    %v1282 = vpop.f32.mrb[0].mxu0
    %v1283 = vadd.f32 0.0, %v1282
    %v1284 = vpop.f32.mrb[0].mxu0
    %v1285 = vadd.f32 0.0, %v1284
    %1286 = vmatprep.mubr.bf16.mxu0 0
    %1287 = vmatmul.mubr.bf16.gmra.mrb[0].mxu0 %v1016
    %v1288 = vpop.f32.mrb[0].mxu0
    %v1289 = vadd.f32 0.0, %v1288
    %v1290 = vpop.f32.mrb[0].mxu0
    %v1291 = vadd.f32 0.0, %v1290
    %v1292 = vpop.f32.mrb[0].mxu0
    %v1293 = vadd.f32 0.0, %v1292
    %v1294 = vpop.f32.mrb[0].mxu0
    %v1295 = vadd.f32 0.0, %v1294
    %1296 = vmatprep.mubr.bf16.mxu0 0
    %1297 = vmatmul.mubr.bf16.gmra.mrb[0].mxu0 %v1017
    %v1298 = vpop.f32.mrb[0].mxu0
    %v1299 = vadd.f32 0.0, %v1298
    %v1300 = vpop.f32.mrb[0].mxu0
    %v1301 = vadd.f32 0.0, %v1300
    %v1302 = vpop.f32.mrb[0].mxu0
    %v1303 = vadd.f32 0.0, %v1302
    %v1304 = vpop.f32.mrb[0].mxu0
    %v1305 = vadd.f32 0.0, %v1304
    %1306 = vdwg.mxu0
    %v1307 = vpack.c.bf16 %v1153, %v1149
    %v1308 = vpack.c.bf16 %v1163, %v1159
    %v1309 = vpack.c.bf16 %v1173, %v1169
    %v1310 = vpack.c.bf16 %v1183, %v1179
    %v1311 = vpack.c.bf16 %v1193, %v1189
    %v1312 = vpack.c.bf16 %v1203, %v1199
    %v1313 = vpack.c.bf16 %v1213, %v1209
    %v1314 = vpack.c.bf16 %v1223, %v1219
    %v1315 = vpack.c.bf16 %v1233, %v1229
    %v1316 = vpack.c.bf16 %v1243, %v1239
    %v1317 = vpack.c.bf16 %v1253, %v1249
    %v1318 = vpack.c.bf16 %v1263, %v1259
    %v1319 = vpack.c.bf16 %v1273, %v1269
    %v1320 = vpack.c.bf16 %v1283, %v1279
    %v1321 = vpack.c.bf16 %v1293, %v1289
    %v1322 = vpack.c.bf16 %v1303, %v1299
    %v1339 = vunpack.c.l.b16 %v1307
    %v1340 = vunpack.c.h.b16 %v1307
    %v1341 = vunpack.c.l.b16 %v1308
    %v1342 = vunpack.c.h.b16 %v1308
    %v1343 = vunpack.c.l.b16 %v1309
    %v1344 = vunpack.c.h.b16 %v1309
    %v1345 = vunpack.c.l.b16 %v1310
    %v1346 = vunpack.c.h.b16 %v1310
    %v1347 = vunpack.c.l.b16 %v1311
    %v1348 = vunpack.c.h.b16 %v1311
    %v1349 = vunpack.c.l.b16 %v1312
    %v1350 = vunpack.c.h.b16 %v1312
    %v1351 = vunpack.c.l.b16 %v1313
    %v1352 = vunpack.c.h.b16 %v1313
    %v1353 = vunpack.c.l.b16 %v1314
    %v1354 = vunpack.c.h.b16 %v1314
    %v1355 = vunpack.c.l.b16 %v1315
    %v1356 = vunpack.c.h.b16 %v1315
    %v1357 = vunpack.c.l.b16 %v1316
    %v1358 = vunpack.c.h.b16 %v1316
    %v1359 = vunpack.c.l.b16 %v1317
    %v1360 = vunpack.c.h.b16 %v1317
    %v1361 = vunpack.c.l.b16 %v1318
    %v1362 = vunpack.c.h.b16 %v1318
    %v1363 = vunpack.c.l.b16 %v1319
    %v1364 = vunpack.c.h.b16 %v1319
    %v1365 = vunpack.c.l.b16 %v1320
    %v1366 = vunpack.c.h.b16 %v1320
    %v1367 = vunpack.c.l.b16 %v1321
    %v1368 = vunpack.c.h.b16 %v1321
    %v1369 = vunpack.c.l.b16 %v1322
    %v1370 = vunpack.c.h.b16 %v1322
    %v1371 = vpack.c.b16 %v1339, %v1339
    %v1372 = vpack.c.b16 %v1340, %v1340
    %v1373 = vpack.c.b16 %v1341, %v1341
    %v1374 = vpack.c.b16 %v1342, %v1342
    %v1375 = vpack.c.b16 %v1343, %v1343
    %v1376 = vpack.c.b16 %v1344, %v1344
    %v1377 = vpack.c.b16 %v1345, %v1345
    %v1378 = vpack.c.b16 %v1346, %v1346
    %v1379 = vpack.c.b16 %v1347, %v1347
    %v1380 = vpack.c.b16 %v1348, %v1348
    %v1381 = vpack.c.b16 %v1349, %v1349
    %v1382 = vpack.c.b16 %v1350, %v1350
    %v1383 = vpack.c.b16 %v1351, %v1351
    %v1384 = vpack.c.b16 %v1352, %v1352
    %v1385 = vpack.c.b16 %v1353, %v1353
    %v1386 = vpack.c.b16 %v1354, %v1354
    %v1387 = vpack.c.b16 %v1355, %v1355
    %v1388 = vpack.c.b16 %v1356, %v1356
    %v1389 = vpack.c.b16 %v1357, %v1357
    %v1390 = vpack.c.b16 %v1358, %v1358
    %v1391 = vpack.c.b16 %v1359, %v1359
    %v1392 = vpack.c.b16 %v1360, %v1360
    %v1393 = vpack.c.b16 %v1361, %v1361
    %v1394 = vpack.c.b16 %v1362, %v1362
    %v1395 = vpack.c.b16 %v1363, %v1363
    %v1396 = vpack.c.b16 %v1364, %v1364
    %v1397 = vpack.c.b16 %v1365, %v1365
    %v1398 = vpack.c.b16 %v1366, %v1366
    %v1399 = vpack.c.b16 %v1367, %v1367
    %v1400 = vpack.c.b16 %v1368, %v1368
    %v1401 = vpack.c.b16 %v1369, %v1369
    %v1402 = vpack.c.b16 %v1370, %v1370
    %1435 = vst [vmem:[%s6] sm:$0xf] %v1371
    %1436 = vst [vmem:[%s6 + $0x4] sm:$0xf] %v1372
    %1437 = vst [vmem:[%s6 + $0x8] sm:$0xf] %v1373
    %1438 = vst [vmem:[%s6 + $0xc] sm:$0xf] %v1374
    %1439 = vst [vmem:[%s6 + $0x10] sm:$0xf] %v1375
    %1440 = vst [vmem:[%s6 + $0x14] sm:$0xf] %v1376
    %1441 = vst [vmem:[%s6 + $0x18] sm:$0xf] %v1377
    %1442 = vst [vmem:[%s6 + $0x1c] sm:$0xf] %v1378
    %1443 = vst [vmem:[%s6 + $0x20] sm:$0xf] %v1379
    %1444 = vst [vmem:[%s6 + $0x24] sm:$0xf] %v1380
    %1445 = vst [vmem:[%s6 + $0x28] sm:$0xf] %v1381
    %1446 = vst [vmem:[%s6 + $0x2c] sm:$0xf] %v1382
    %1447 = vst [vmem:[%s6 + $0x30] sm:$0xf] %v1383
    %1448 = vst [vmem:[%s6 + $0x34] sm:$0xf] %v1384
    %1449 = vst [vmem:[%s6 + $0x38] sm:$0xf] %v1385
    %1450 = vst [vmem:[%s6 + $0x3c] sm:$0xf] %v1386
    %1451 = vst [vmem:[%s6 + $0x40] sm:$0xf] %v1387
    %1452 = vst [vmem:[%s6 + $0x44] sm:$0xf] %v1388
    %1453 = vst [vmem:[%s6 + $0x48] sm:$0xf] %v1389
    %1454 = vst [vmem:[%s6 + $0x4c] sm:$0xf] %v1390
    %1455 = vst [vmem:[%s6 + $0x50] sm:$0xf] %v1391
    %1456 = vst [vmem:[%s6 + $0x54] sm:$0xf] %v1392
    %1457 = vst [vmem:[%s6 + $0x58] sm:$0xf] %v1393
    %1458 = vst [vmem:[%s6 + $0x5c] sm:$0xf] %v1394
    %1459 = vst [vmem:[%s6 + $0x60] sm:$0xf] %v1395
    %1460 = vst [vmem:[%s6 + $0x64] sm:$0xf] %v1396
    %1461 = vst [vmem:[%s6 + $0x68] sm:$0xf] %v1397
    %1462 = vst [vmem:[%s6 + $0x6c] sm:$0xf] %v1398
    %1463 = vst [vmem:[%s6 + $0x70] sm:$0xf] %v1399
    %1464 = vst [vmem:[%s6 + $0x74] sm:$0xf] %v1400
    %1465 = vst [vmem:[%s6 + $0x78] sm:$0xf] %v1401
    %1466 = vst [vmem:[%s6 + $0x7c] sm:$0xf] %v1402
    %v1467 = vpack.c.bf16 %v1155, %v1151
    %v1468 = vpack.c.bf16 %v1165, %v1161
    %v1469 = vpack.c.bf16 %v1175, %v1171
    %v1470 = vpack.c.bf16 %v1185, %v1181
    %v1471 = vpack.c.bf16 %v1195, %v1191
    %v1472 = vpack.c.bf16 %v1205, %v1201
    %v1473 = vpack.c.bf16 %v1215, %v1211
    %v1474 = vpack.c.bf16 %v1225, %v1221
    %v1475 = vpack.c.bf16 %v1235, %v1231
    %v1476 = vpack.c.bf16 %v1245, %v1241
    %v1477 = vpack.c.bf16 %v1255, %v1251
    %v1478 = vpack.c.bf16 %v1265, %v1261
    %v1479 = vpack.c.bf16 %v1275, %v1271
    %v1480 = vpack.c.bf16 %v1285, %v1281
    %v1481 = vpack.c.bf16 %v1295, %v1291
    %v1482 = vpack.c.bf16 %v1305, %v1301
    %v1499 = vunpack.c.l.b16 %v1467
    %v1500 = vunpack.c.h.b16 %v1467
    %v1501 = vunpack.c.l.b16 %v1468
    %v1502 = vunpack.c.h.b16 %v1468
    %v1503 = vunpack.c.l.b16 %v1469
    %v1504 = vunpack.c.h.b16 %v1469
    %v1505 = vunpack.c.l.b16 %v1470
    %v1506 = vunpack.c.h.b16 %v1470
    %v1507 = vunpack.c.l.b16 %v1471
    %v1508 = vunpack.c.h.b16 %v1471
    %v1509 = vunpack.c.l.b16 %v1472
    %v1510 = vunpack.c.h.b16 %v1472
    %v1511 = vunpack.c.l.b16 %v1473
    %v1512 = vunpack.c.h.b16 %v1473
    %v1513 = vunpack.c.l.b16 %v1474
    %v1514 = vunpack.c.h.b16 %v1474
    %v1515 = vunpack.c.l.b16 %v1475
    %v1516 = vunpack.c.h.b16 %v1475
    %v1517 = vunpack.c.l.b16 %v1476
    %v1518 = vunpack.c.h.b16 %v1476
    %v1519 = vunpack.c.l.b16 %v1477
    %v1520 = vunpack.c.h.b16 %v1477
    %v1521 = vunpack.c.l.b16 %v1478
    %v1522 = vunpack.c.h.b16 %v1478
    %v1523 = vunpack.c.l.b16 %v1479
    %v1524 = vunpack.c.h.b16 %v1479
    %v1525 = vunpack.c.l.b16 %v1480
    %v1526 = vunpack.c.h.b16 %v1480
    %v1527 = vunpack.c.l.b16 %v1481
    %v1528 = vunpack.c.h.b16 %v1481
    %v1529 = vunpack.c.l.b16 %v1482
    %v1530 = vunpack.c.h.b16 %v1482
    %v1531 = vpack.c.b16 %v1499, %v1499
    %v1532 = vpack.c.b16 %v1500, %v1500
    %v1533 = vpack.c.b16 %v1501, %v1501
    %v1534 = vpack.c.b16 %v1502, %v1502
    %v1535 = vpack.c.b16 %v1503, %v1503
    %v1536 = vpack.c.b16 %v1504, %v1504
    %v1537 = vpack.c.b16 %v1505, %v1505
    %v1538 = vpack.c.b16 %v1506, %v1506
    %v1539 = vpack.c.b16 %v1507, %v1507
    %v1540 = vpack.c.b16 %v1508, %v1508
    %v1541 = vpack.c.b16 %v1509, %v1509
    %v1542 = vpack.c.b16 %v1510, %v1510
    %v1543 = vpack.c.b16 %v1511, %v1511
    %v1544 = vpack.c.b16 %v1512, %v1512
    %v1545 = vpack.c.b16 %v1513, %v1513
    %v1546 = vpack.c.b16 %v1514, %v1514
    %v1547 = vpack.c.b16 %v1515, %v1515
    %v1548 = vpack.c.b16 %v1516, %v1516
    %v1549 = vpack.c.b16 %v1517, %v1517
    %v1550 = vpack.c.b16 %v1518, %v1518
    %v1551 = vpack.c.b16 %v1519, %v1519
    %v1552 = vpack.c.b16 %v1520, %v1520
    %v1553 = vpack.c.b16 %v1521, %v1521
    %v1554 = vpack.c.b16 %v1522, %v1522
    %v1555 = vpack.c.b16 %v1523, %v1523
    %v1556 = vpack.c.b16 %v1524, %v1524
    %v1557 = vpack.c.b16 %v1525, %v1525
    %v1558 = vpack.c.b16 %v1526, %v1526
    %v1559 = vpack.c.b16 %v1527, %v1527
    %v1560 = vpack.c.b16 %v1528, %v1528
    %v1561 = vpack.c.b16 %v1529, %v1529
    %v1562 = vpack.c.b16 %v1530, %v1530
    %1595 = vst [vmem:[%s7] sm:$0xf] %v1531
    %1596 = vst [vmem:[%s7 + $0x4] sm:$0xf] %v1532
    %1597 = vst [vmem:[%s7 + $0x8] sm:$0xf] %v1533
    %1598 = vst [vmem:[%s7 + $0xc] sm:$0xf] %v1534
    %1599 = vst [vmem:[%s7 + $0x10] sm:$0xf] %v1535
    %1600 = vst [vmem:[%s7 + $0x14] sm:$0xf] %v1536
    %1601 = vst [vmem:[%s7 + $0x18] sm:$0xf] %v1537
    %1602 = vst [vmem:[%s7 + $0x1c] sm:$0xf] %v1538
    %1603 = vst [vmem:[%s7 + $0x20] sm:$0xf] %v1539
    %1604 = vst [vmem:[%s7 + $0x24] sm:$0xf] %v1540
    %1605 = vst [vmem:[%s7 + $0x28] sm:$0xf] %v1541
    %1606 = vst [vmem:[%s7 + $0x2c] sm:$0xf] %v1542
    %1607 = vst [vmem:[%s7 + $0x30] sm:$0xf] %v1543
    %1608 = vst [vmem:[%s7 + $0x34] sm:$0xf] %v1544
    %1609 = vst [vmem:[%s7 + $0x38] sm:$0xf] %v1545
    %1610 = vst [vmem:[%s7 + $0x3c] sm:$0xf] %v1546
    %1611 = vst [vmem:[%s7 + $0x40] sm:$0xf] %v1547
    %1612 = vst [vmem:[%s7 + $0x44] sm:$0xf] %v1548
    %1613 = vst [vmem:[%s7 + $0x48] sm:$0xf] %v1549
    %1614 = vst [vmem:[%s7 + $0x4c] sm:$0xf] %v1550
    %1615 = vst [vmem:[%s7 + $0x50] sm:$0xf] %v1551
    %1616 = vst [vmem:[%s7 + $0x54] sm:$0xf] %v1552
    %1617 = vst [vmem:[%s7 + $0x58] sm:$0xf] %v1553
    %1618 = vst [vmem:[%s7 + $0x5c] sm:$0xf] %v1554
    %1619 = vst [vmem:[%s7 + $0x60] sm:$0xf] %v1555
    %1620 = vst [vmem:[%s7 + $0x64] sm:$0xf] %v1556
    %1621 = vst [vmem:[%s7 + $0x68] sm:$0xf] %v1557
    %1622 = vst [vmem:[%s7 + $0x6c] sm:$0xf] %v1558
    %1623 = vst [vmem:[%s7 + $0x70] sm:$0xf] %v1559
    %1624 = vst [vmem:[%s7 + $0x74] sm:$0xf] %v1560
    %1625 = vst [vmem:[%s7 + $0x78] sm:$0xf] %v1561
    %1626 = vst [vmem:[%s7 + $0x7c] sm:$0xf] %v1562
  $region33: #{graphsage_forward.2} parent=0 // pred_fallthru
    _
  // Predicated region
  $region34: #{graphsage_forward.2} parent=0 // pred_check
    _
  $region35: #{graphsage_forward.2} parent=0 // pred_check_branch
    %1628 = sbr.rel (0) target = $region37
  $region36: #{graphsage_forward.2} parent=0 // pred_region
    _
  $region37: #{graphsage_forward.2} parent=0 // pred_fallthru
    _
  // Predicated region
  $region38: #{graphsage_forward.2} parent=0 // pred_check
    _
  $region39: #{graphsage_forward.2} parent=0 // pred_check_branch
    %1630 = sbr.rel (0) target = $region41
  $region40: #{graphsage_forward.2} parent=0 // pred_region
    _
  $region41: #{graphsage_forward.2} parent=0 // pred_fallthru
    _
  // Predicated region
  $region42: #{graphsage_forward.2} parent=0 // pred_check
    _
  $region43: #{graphsage_forward.2} parent=0 // pred_check_branch
    %1632 = sbr.rel (0) target = $region45
  $region44: #{graphsage_forward.2} parent=0 // pred_region
    _
  $region45: #{graphsage_forward.2} parent=0 // pred_fallthru
    _
  // Predicated region
  $region46: #{graphsage_forward.2} parent=0 // pred_check
    _
  $region47: #{graphsage_forward.2} parent=0 // pred_check_branch
    %1634 = sbr.rel (0) target = $region49
  $region48: #{graphsage_forward.2} parent=0 // pred_region
    _
  $region49: #{graphsage_forward.2} parent=0 // pred_fallthru
    _

</llo_original>
